<compile_context>
chip_gen: v7x
topology: tpu7x:2x2x1
jax: 0.10.0
libtpu: 0.0.40
codegen_flags: <defaults>
</compile_context>

<pallas_src>
import functools

import jax
import jax.numpy as jnp
from jax.experimental import pallas as pl
from jax.experimental.pallas import tpu as pltpu

EPS = 1e-5
_LANE = 128
_NEG_BIG = -1e30  # bias for padded class lanes -> exp() underflows to 0


def _round_up(x, m):
    return (x + m - 1) // m * m


def _mlp_kernel(x_ref,
                w1_ref, b1_ref,
                w2_ref, b2_ref,
                w3_ref, b3_ref,
                logits_ref, preds_ref):
    """One (TM, F) batch tile -> (TM, C_PAD) logits and softmax preds."""
    x = x_ref[...]                                                 # (TM, F) bf16

    # fc1 (+ folded bn1) + relu1 ; dropout1 is identity at eval.
    h = jnp.dot(x, w1_ref[...], preferred_element_type=jnp.float32) + b1_ref[...]
    h = jnp.maximum(h, 0.0).astype(w2_ref.dtype)

    # fc2 (+ folded bn2) + relu2 ; dropout2 is identity at eval.
    h = jnp.dot(h, w2_ref[...], preferred_element_type=jnp.float32) + b2_ref[...]
    h = jnp.maximum(h, 0.0).astype(w3_ref.dtype)

    # fc_out.  Padded class lanes carry a -1e30 bias so softmax ignores them.
    logits = jnp.dot(h, w3_ref[...], preferred_element_type=jnp.float32) + b3_ref[...]
    logits_ref[...] = logits.astype(logits_ref.dtype)

    # Numerically-stable softmax over the lane-dense (128-wide) class axis.
    m = jnp.max(logits, axis=-1, keepdims=True)
    e = jnp.exp(logits - m)
    denom = jnp.sum(e, axis=-1, keepdims=True)
    preds_ref[...] = (e * pl.reciprocal(denom, approx=True)).astype(preds_ref.dtype)


def _prepare_params(params, num_classes, compute_dtype=jnp.bfloat16):
    """Fold eval-mode BatchNorm into fc weights/biases (f32), pad the class
    dim to a multiple of 128 lanes, cast weights to the MXU compute dtype."""
    s1 = params["g1"] * jax.lax.rsqrt(params["v1"] + EPS)             # (1, H)
    w1 = (params["w1"].astype(jnp.float32) * s1).astype(compute_dtype)
    b1 = ((params["b1"] - params["m1"]) * s1 + params["be1"]).astype(jnp.float32)

    s2 = params["g2"] * jax.lax.rsqrt(params["v2"] + EPS)
    w2 = (params["w2"].astype(jnp.float32) * s2).astype(compute_dtype)
    b2 = ((params["b2"] - params["m2"]) * s2 + params["be2"]).astype(jnp.float32)

    hidden = params["w3"].shape[0]
    c_pad = _round_up(max(num_classes, _LANE), _LANE)
    w3 = jnp.zeros((hidden, c_pad), jnp.float32).at[:, :num_classes].set(
        params["w3"].astype(jnp.float32))
    w3 = w3.astype(compute_dtype)
    b3 = jnp.full((1, c_pad), _NEG_BIG, jnp.float32).at[:, :num_classes].set(
        params["b3"].astype(jnp.float32))
    return w1, b1, w2, b2, w3, b3, c_pad


@functools.partial(jax.jit, static_argnames=("num_classes", "block_m"))
def nonlinear_classifier_forward(x_nchw, params, *, num_classes, block_m=128):
    """x_nchw: (N, C, H, W) float32.  Returns (logits, preds), each (N, num_classes)."""
    n = x_nchw.shape[0]
    # Glue: flatten exactly like nn.Flatten (row-major over C, H, W).
    x_flat = x_nchw.reshape(n, -1)
    f = x_flat.shape[1]

    w1, b1, w2, b2, w3, b3, c_pad = _prepare_params(params, num_classes)
    hidden = w1.shape[1]

    # Batch tiling: TM rows per grid step (multiple of 8 sublanes).
    tm = min(block_m, _round_up(n, 8))
    n_pad = _round_up(n, tm)
    x_c = x_flat.astype(w1.dtype)
    if n_pad != n:
        x_c = jnp.pad(x_c, ((0, n_pad - n), (0, 0)))

    tile = lambda i: (i, 0)      # batch-tiled operands
    const = lambda i: (0, 0)     # weights/biases: same block every step -> resident

    logits_pad, preds_pad = pl.pallas_call(
        _mlp_kernel,
        out_shape=(
            jax.ShapeDtypeStruct((n_pad, c_pad), jnp.float32),
            jax.ShapeDtypeStruct((n_pad, c_pad), jnp.float32),
        ),
        grid=(n_pad // tm,),
        in_specs=[
            pl.BlockSpec((tm, f), tile),            # x
            pl.BlockSpec((f, hidden), const),       # w1 (BN-folded, bf16)
            pl.BlockSpec((1, hidden), const),       # b1 (f32)
            pl.BlockSpec((hidden, hidden), const),  # w2
            pl.BlockSpec((1, hidden), const),       # b2
            pl.BlockSpec((hidden, c_pad), const),   # w3 (class-padded)
            pl.BlockSpec((1, c_pad), const),        # b3 (padded lanes = -1e30)
        ],
        out_specs=(
            pl.BlockSpec((tm, c_pad), tile),
            pl.BlockSpec((tm, c_pad), tile),
        ),
        compiler_params=pltpu.CompilerParams(
            dimension_semantics=("parallel",),       # v7x: shard batch over 2 TCs
            vmem_limit_bytes=32 * 1024 * 1024,       # safe on v5e/v6e/v7x
        ),
    )(x_c, w1, b1, w2, b2, w3, b3)

    return logits_pad[:n, :num_classes], preds_pad[:n, :num_classes]


def init_params(key, input_vector_len, hidden, num_classes):
    """Xavier-uniform weights / zero bias (like the module's initialize()).
    BatchNorm params/stats are given non-trivial values so the BN fold is
    actually exercised; PyTorch defaults (g=1, be=0, m=0, v=1) also work."""
    k1, k2, k3, kb = jax.random.split(key, 4)
    kb1, kb2, kb3, kb4, kb5, kb6, kb7, kb8 = jax.random.split(kb, 8)

    def xavier(k, fan_in, fan_out):
        limit = jnp.sqrt(6.0 / (fan_in + fan_out))
        # stored as (in, out) so the kernel does x @ W
        return jax.random.uniform(k, (fan_in, fan_out), jnp.float32, -limit, limit)

    return {
        "w1": xavier(k1, input_vector_len, hidden),
        "b1": jnp.zeros((1, hidden), jnp.float32),
        "g1": jax.random.uniform(kb1, (1, hidden), jnp.float32, 0.8, 1.2),
        "be1": 0.05 * jax.random.normal(kb2, (1, hidden), jnp.float32),
        "m1": 0.05 * jax.random.normal(kb3, (1, hidden), jnp.float32),
        "v1": jax.random.uniform(kb4, (1, hidden), jnp.float32, 0.8, 1.2),
        "w2": xavier(k2, hidden, hidden),
        "b2": jnp.zeros((1, hidden), jnp.float32),
        "g2": jax.random.uniform(kb5, (1, hidden), jnp.float32, 0.8, 1.2),
        "be2": 0.05 * jax.random.normal(kb6, (1, hidden), jnp.float32),
        "m2": 0.05 * jax.random.normal(kb7, (1, hidden), jnp.float32),
        "v2": jax.random.uniform(kb8, (1, hidden), jnp.float32, 0.8, 1.2),
        "w3": xavier(k3, hidden, num_classes),
        "b3": jnp.zeros((1, num_classes), jnp.float32),
    }


if __name__ == "__main__":
    # Small shapes consistent with the module:
    #   num_channels_in=4, spatial_size=8 -> input_vector_len = 4*8*8 = 256
    #   hidden = 512 (hard-coded in the module), num_classes = 10
    #   batch = 256 so the 1-D grid actually tiles (TM=128 -> 2 steps).
    NUM_CLASSES = 10
    NUM_CHANNELS_IN = 4
    SPATIAL = 8
    HIDDEN = 512
    BATCH = 256
    INPUT_VECTOR_LEN = NUM_CHANNELS_IN * SPATIAL * SPATIAL

    key = jax.random.PRNGKey(0)
    kx, kp = jax.random.split(key)
    x = jax.random.normal(kx, (BATCH, NUM_CHANNELS_IN, SPATIAL, SPATIAL), jnp.float32)
    params = init_params(kp, INPUT_VECTOR_LEN, HIDDEN, NUM_CLASSES)

    logits, preds = nonlinear_classifier_forward(x, params, num_classes=NUM_CLASSES)
    jax.block_until_ready((logits, preds))
    assert logits.shape == (BATCH, NUM_CLASSES) and preds.shape == (BATCH, NUM_CLASSES)

    # --- Reference 1: exact module semantics, unfolded BN, full f32 (loose:
    #     the kernel uses bf16 weights/activations). ---
    def ref_f32(x_nchw, p):
        h = x_nchw.reshape(x_nchw.shape[0], -1)
        h = h @ p["w1"] + p["b1"]
        h = (h - p["m1"]) * jax.lax.rsqrt(p["v1"] + EPS) * p["g1"] + p["be1"]
        h = jnp.maximum(h, 0.0)
        h = h @ p["w2"] + p["b2"]
        h = (h - p["m2"]) * jax.lax.rsqrt(p["v2"] + EPS) * p["g2"] + p["be2"]
        h = jnp.maximum(h, 0.0)
        lg = h @ p["w3"] + p["b3"]
        return lg, jax.nn.softmax(lg, axis=-1)

    lg_ref, pr_ref = ref_f32(x, params)
    assert jnp.allclose(logits, lg_ref, atol=1e-1), "logits vs f32 reference"
    assert jnp.allclose(preds, pr_ref, atol=3e-2), "preds vs f32 reference"

    # --- Reference 2: identical folded-BN / bf16 / f32-accum path outside
    #     Pallas (tight). ---
    w1, b1, w2, b2, w3, b3, _ = _prepare_params(params, NUM_CLASSES)
    xb = x.reshape(BATCH, -1).astype(w1.dtype)
    h = jnp.dot(xb, w1, preferred_element_type=jnp.float32) + b1
    h = jnp.maximum(h, 0.0).astype(w2.dtype)
    h = jnp.dot(h, w2, preferred_element_type=jnp.float32) + b2
    h = jnp.maximum(h, 0.0).astype(w3.dtype)
    lg2 = jnp.dot(h, w3, preferred_element_type=jnp.float32) + b3
    pr2 = jax.nn.softmax(lg2, axis=-1)
    assert jnp.allclose(logits, lg2[:, :NUM_CLASSES], atol=1e-2, rtol=1e-2), \
        "logits vs matched bf16 reference"
    assert jnp.allclose(preds, pr2[:, :NUM_CLASSES], atol=2e-3), \
        "preds vs matched bf16 reference"

    print("KERNEL_OK")
</pallas_src>

<mosaic_0001>
module attributes {stable_mosaic.version = 11 : i64} {
  func.func @_mlp_kernel(%arg0: i32, %arg1: memref<128x256xbf16, #tpu.memory_space<vmem>>, %arg2: memref<256x512xbf16, #tpu.memory_space<vmem>>, %arg3: memref<1x512xf32, #tpu.memory_space<vmem>>, %arg4: memref<512x512xbf16, #tpu.memory_space<vmem>>, %arg5: memref<1x512xf32, #tpu.memory_space<vmem>>, %arg6: memref<512x128xbf16, #tpu.memory_space<vmem>>, %arg7: memref<1x128xf32, #tpu.memory_space<vmem>>, %arg8: memref<128x128xf32, #tpu.memory_space<vmem>>, %arg9: memref<128x128xf32, #tpu.memory_space<vmem>>) attributes {dimension_semantics = [#tpu.dimension_semantics<parallel>], iteration_bounds = array<i64: 2>, scalar_prefetch = 0 : i64, scratch_operands = 0 : i64, tpu.core_type = #tpu.core_type<tc>, window_params = [{transform_indices = @transform_0, window_bounds = array<i64: 128, 256>}, {pipeline_mode = #tpu.pipeline_mode<synchronous>, transform_indices = @transform_1, window_bounds = array<i64: 256, 512>}, {pipeline_mode = #tpu.pipeline_mode<synchronous>, transform_indices = @transform_2, window_bounds = array<i64: 1, 512>}, {pipeline_mode = #tpu.pipeline_mode<synchronous>, transform_indices = @transform_3, window_bounds = array<i64: 512, 512>}, {pipeline_mode = #tpu.pipeline_mode<synchronous>, transform_indices = @transform_4, window_bounds = array<i64: 1, 512>}, {pipeline_mode = #tpu.pipeline_mode<synchronous>, transform_indices = @transform_5, window_bounds = array<i64: 512, 128>}, {pipeline_mode = #tpu.pipeline_mode<synchronous>, transform_indices = @transform_6, window_bounds = array<i64: 1, 128>}, {transform_indices = @transform_7, window_bounds = array<i64: 128, 128>}, {transform_indices = @transform_8, window_bounds = array<i64: 128, 128>}]} {
    %c0 = arith.constant 0 : index
    %c0_0 = arith.constant 0 : index
    %0 = vector.load %arg1[%c0, %c0_0] : memref<128x256xbf16, #tpu.memory_space<vmem>>, vector<128x256xbf16>
    %c0_1 = arith.constant 0 : index
    %c0_2 = arith.constant 0 : index
    %1 = vector.load %arg2[%c0_1, %c0_2] : memref<256x512xbf16, #tpu.memory_space<vmem>>, vector<256x512xbf16>
    %cst = arith.constant dense<0.000000e+00> : vector<128x512xf32>
    %2 = tpu.matmul %0, %1, %cst {dimension_numbers = #tpu.dot_dimension_numbers<[1], [0], [0], [1], [0, 0, 1, 1], [], []>} : vector<128x256xbf16>, vector<256x512xbf16>, vector<128x512xf32> -> vector<128x512xf32>
    %c0_3 = arith.constant 0 : index
    %c0_4 = arith.constant 0 : index
    %3 = vector.load %arg3[%c0_3, %c0_4] : memref<1x512xf32, #tpu.memory_space<vmem>>, vector<1x512xf32>
    %4 = vector.broadcast %3 : vector<1x512xf32> to vector<128x512xf32>
    %5 = arith.addf %2, %4 : vector<128x512xf32>
    %cst_5 = arith.constant 0.000000e+00 : f32
    %6 = vector.broadcast %cst_5 : f32 to vector<128x512xf32>
    %7 = arith.maximumf %5, %6 : vector<128x512xf32>
    %8 = arith.truncf %7 : vector<128x512xf32> to vector<128x512xbf16>
    %c0_6 = arith.constant 0 : index
    %c0_7 = arith.constant 0 : index
    %9 = vector.load %arg4[%c0_6, %c0_7] : memref<512x512xbf16, #tpu.memory_space<vmem>>, vector<512x512xbf16>
    %cst_8 = arith.constant dense<0.000000e+00> : vector<128x512xf32>
    %10 = tpu.matmul %8, %9, %cst_8 {dimension_numbers = #tpu.dot_dimension_numbers<[1], [0], [0], [1], [0, 0, 1, 1], [], []>} : vector<128x512xbf16>, vector<512x512xbf16>, vector<128x512xf32> -> vector<128x512xf32>
    %c0_9 = arith.constant 0 : index
    %c0_10 = arith.constant 0 : index
    %11 = vector.load %arg5[%c0_9, %c0_10] : memref<1x512xf32, #tpu.memory_space<vmem>>, vector<1x512xf32>
    %12 = vector.broadcast %11 : vector<1x512xf32> to vector<128x512xf32>
    %13 = arith.addf %10, %12 : vector<128x512xf32>
    %cst_11 = arith.constant 0.000000e+00 : f32
    %14 = vector.broadcast %cst_11 : f32 to vector<128x512xf32>
    %15 = arith.maximumf %13, %14 : vector<128x512xf32>
    %16 = arith.truncf %15 : vector<128x512xf32> to vector<128x512xbf16>
    %c0_12 = arith.constant 0 : index
    %c0_13 = arith.constant 0 : index
    %17 = vector.load %arg6[%c0_12, %c0_13] : memref<512x128xbf16, #tpu.memory_space<vmem>>, vector<512x128xbf16>
    %cst_14 = arith.constant dense<0.000000e+00> : vector<128x128xf32>
    %18 = tpu.matmul %16, %17, %cst_14 {dimension_numbers = #tpu.dot_dimension_numbers<[1], [0], [0], [1], [0, 0, 1, 1], [], []>} : vector<128x512xbf16>, vector<512x128xbf16>, vector<128x128xf32> -> vector<128x128xf32>
    %c0_15 = arith.constant 0 : index
    %c0_16 = arith.constant 0 : index
    %19 = vector.load %arg7[%c0_15, %c0_16] : memref<1x128xf32, #tpu.memory_space<vmem>>, vector<1x128xf32>
    %20 = vector.broadcast %19 : vector<1x128xf32> to vector<128x128xf32>
    %21 = arith.addf %18, %20 : vector<128x128xf32>
    %c0_17 = arith.constant 0 : index
    %c0_18 = arith.constant 0 : index
    %22 = vector.load %arg8[%c0_17, %c0_18] : memref<128x128xf32, #tpu.memory_space<vmem>>, vector<128x128xf32>
    tpu.vector_store %arg8[%c0_17, %c0_18], %21 {strides = array<i32>} : memref<128x128xf32, #tpu.memory_space<vmem>>, vector<128x128xf32>,
    %cst_19 = arith.constant dense<0xFF800000> : vector<128xf32>
    %23 = vector.multi_reduction <maximumf>, %21, %cst_19 [1] : vector<128x128xf32> to vector<128xf32>
    %24 = vector.shape_cast %23 : vector<128xf32> to vector<128x1xf32>
    %25 = vector.broadcast %24 : vector<128x1xf32> to vector<128x128xf32>
    %26 = arith.subf %21, %25 : vector<128x128xf32>
    %27 = math.exp %26 : vector<128x128xf32>
    %cst_20 = arith.constant dense<0.000000e+00> : vector<128xf32>
    %28 = vector.multi_reduction <add>, %27, %cst_20 [1] : vector<128x128xf32> to vector<128xf32>
    %29 = vector.shape_cast %28 : vector<128xf32> to vector<128x1xf32>
    %30 = tpu.reciprocal %29 {approx = true} : vector<128x1xf32> -> vector<128x1xf32>
    %31 = vector.broadcast %30 : vector<128x1xf32> to vector<128x128xf32>
    %32 = arith.mulf %27, %31 : vector<128x128xf32>
    %c0_21 = arith.constant 0 : index
    %c0_22 = arith.constant 0 : index
    %33 = vector.load %arg9[%c0_21, %c0_22] : memref<128x128xf32, #tpu.memory_space<vmem>>, vector<128x128xf32>
    tpu.vector_store %arg9[%c0_21, %c0_22], %32 {strides = array<i32>} : memref<128x128xf32, #tpu.memory_space<vmem>>, vector<128x128xf32>,
    return
  }
  func.func @transform_0(%arg0: i32) -> (i32, i32) {
    %c0_i32 = arith.constant 0 : i32
    %c0_i32_0 = arith.constant 0 : i32
    return %arg0, %c0_i32 : i32, i32
  }
  func.func @transform_1(%arg0: i32) -> (i32, i32) {
    %c0_i32 = arith.constant 0 : i32
    %c0_i32_0 = arith.constant 0 : i32
    %c0_i32_1 = arith.constant 0 : i32
    return %c0_i32, %c0_i32_0 : i32, i32
  }
  func.func @transform_2(%arg0: i32) -> (i32, i32) {
    %c0_i32 = arith.constant 0 : i32
    %c0_i32_0 = arith.constant 0 : i32
    %c0_i32_1 = arith.constant 0 : i32
    return %c0_i32, %c0_i32_0 : i32, i32
  }
  func.func @transform_3(%arg0: i32) -> (i32, i32) {
    %c0_i32 = arith.constant 0 : i32
    %c0_i32_0 = arith.constant 0 : i32
    %c0_i32_1 = arith.constant 0 : i32
    return %c0_i32, %c0_i32_0 : i32, i32
  }
  func.func @transform_4(%arg0: i32) -> (i32, i32) {
    %c0_i32 = arith.constant 0 : i32
    %c0_i32_0 = arith.constant 0 : i32
    %c0_i32_1 = arith.constant 0 : i32
    return %c0_i32, %c0_i32_0 : i32, i32
  }
  func.func @transform_5(%arg0: i32) -> (i32, i32) {
    %c0_i32 = arith.constant 0 : i32
    %c0_i32_0 = arith.constant 0 : i32
    %c0_i32_1 = arith.constant 0 : i32
    return %c0_i32, %c0_i32_0 : i32, i32
  }
  func.func @transform_6(%arg0: i32) -> (i32, i32) {
    %c0_i32 = arith.constant 0 : i32
    %c0_i32_0 = arith.constant 0 : i32
    %c0_i32_1 = arith.constant 0 : i32
    return %c0_i32, %c0_i32_0 : i32, i32
  }
  func.func @transform_7(%arg0: i32) -> (i32, i32) {
    %c0_i32 = arith.constant 0 : i32
    %c0_i32_0 = arith.constant 0 : i32
    return %arg0, %c0_i32 : i32, i32
  }
  func.func @transform_8(%arg0: i32) -> (i32, i32) {
    %c0_i32 = arith.constant 0 : i32
    %c0_i32_0 = arith.constant 0 : i32
    return %arg0, %c0_i32 : i32, i32
  }
}

</mosaic_0001>

<llo_original>
// kernel: nonlinear_classifier_forward.1
$region0: #{nonlinear_classifier_forward.1}
  #allocation0 [shape = 'u32[]', space=smem, size = 0x4, offset = 0x4, fixed_abs, tag = 'smem constant byte address 0x4 - core index']
  #allocation1 [shape = 'u32[144,128]{1,0:T(1,128)}', space=vmem, size = 0x12000, scoped, tag = 'internal scratch']
  %s0 = inlined_call_operand.vmem [shape: bf16[256,256], index: 0, kind: input, shape index: {}]
  %s1 = inlined_call_operand.vmem [shape: bf16[256,512], index: 1, kind: input, shape index: {}]
  %s2 = inlined_call_operand.vmem [shape: f32[1,512], index: 2, kind: input, shape index: {}]
  %s3 = inlined_call_operand.vmem [shape: bf16[512,512], index: 3, kind: input, shape index: {}]
  %s4 = inlined_call_operand.vmem [shape: f32[1,512], index: 4, kind: input, shape index: {}]
  %s5 = inlined_call_operand.vmem [shape: bf16[512,128], index: 5, kind: input, shape index: {}]
  %s6 = inlined_call_operand.vmem [shape: f32[1,128], index: 6, kind: input, shape index: {}]
  %s7 = inlined_call_operand.vmem [shape: f32[256,128], index: 7, kind: output, shape index: {0}]
  %s8 = inlined_call_operand.vmem [shape: f32[256,128], index: 8, kind: output, shape index: {1}]
  %9 = xla_tuple %s7, %s8
  %s10 = sld [smem:[#allocation0]]
  $region69: #{nonlinear_classifier_forward.1} parent=0
    _
  %s12 = ssub.s32 1, %s10
  %s13 = scalar_select 0, %s12, %s10
  loop: start=0, step=1, limit=4
  $region2: #{nonlinear_classifier_forward.1} parent=0 // loop_pre_header
    _
  $region3: #{nonlinear_classifier_forward.1} parent=0 // loop_header
    %s15 = sphi 0, %s19
    %p16 = scmp.ge.s32.totalorder %s15, 4
    %s25 = sphi 0, %s27
    %s28 = sphi 0, %s25
    %s29 = sphi 0, %s28
    %s45 = sphi 0, %s29
    %s49 = sphi 0, %s49
    %s51 = sphi 0, %s49
    %s52 = sphi 0, %s51
    %s66 = sphi 0, %s52
    %s70 = sphi 0, %s70
    %s72 = sphi 0, %s70
    %s73 = sphi 0, %s72
    %s87 = sphi 0, %s73
    %s91 = sphi 0, %s91
    %s93 = sphi 0, %s91
    %s94 = sphi 0, %s93
    %s108 = sphi 0, %s94
    %s112 = sphi 0, %s112
    %s114 = sphi 0, %s112
    %s115 = sphi 0, %s114
    %s129 = sphi 0, %s115
    %s133 = sphi 0, %s133
    %s135 = sphi 0, %s133
    %s136 = sphi 0, %s135
    %s150 = sphi 0, %s136
    %s154 = sphi 0, %s154
    %s156 = sphi 0, %s154
    %s157 = sphi 0, %s156
    %s171 = sphi 0, %s157
    %s177 = sphi 0, %s179
    %s180 = sphi 0, %s177
    %s181 = sphi 0, %s180
    %s197 = sphi 0, %s181
    %s203 = sphi 0, %s205
    %s206 = sphi 0, %s203
    %s207 = sphi 0, %s206
    %s223 = sphi 0, %s207
  $region4: #{nonlinear_classifier_forward.1} parent=0 // loop_header_branch
    %18 = sbr.rel (%p16) target = $region8
  $region5: #{nonlinear_classifier_forward.1} parent=0 // loop_body
    %s20 = ssub.s32 %s15, 1
    %s21 = ssub.s32 %s15, 2
    %s22 = sadd.s32 %s15, 1
    %s23 = ssub.s32 %s15, %s22
    %p24 = scmp.eq.s32.totalorder %s23, 0
    %s26 = sadd.s32 %s25, 1
    %s27 = scalar_select %p24, %s25, %s26
    %p30 = pneg %p24
    %p31 = scmp.eq.s32.totalorder %s15, 1
    %p32 = por %p30, %p31
    %p33 = scmp.ne.s32.totalorder %s25, %s28
    %p34 = scmp.eq.s32.totalorder %s15, 0
    %p35 = por %p33, %p34
    %p36 = scmp.ne.s32.totalorder %s25, %s28
    %p37 = scmp.eq.s32.totalorder %s20, 1
    %p38 = por %p36, %p37
    %p39 = scmp.ne.s32.totalorder %s28, %s29
    %p40 = scmp.eq.s32.totalorder %s20, 0
    %p41 = por %p39, %p40
    %p42 = scmp.ne.s32.totalorder %s28, %s29
    %p43 = scmp.eq.s32.totalorder %s21, 1
    %p44 = por %p42, %p43
    %p46 = scmp.ne.s32.totalorder %s29, %s45
    %p47 = scmp.eq.s32.totalorder %s21, 0
    %p48 = por %p46, %p47
    %s50 = sadd.s32 %s49, 1
    %p53 = scmp.eq.s32.totalorder %s15, 1
    %p54 = scmp.ne.s32.totalorder %s49, %s51
    %p55 = scmp.eq.s32.totalorder %s15, 0
    %p56 = por %p54, %p55
    %p57 = scmp.ne.s32.totalorder %s49, %s51
    %p58 = scmp.eq.s32.totalorder %s20, 1
    %p59 = por %p57, %p58
    %p60 = scmp.ne.s32.totalorder %s51, %s52
    %p61 = scmp.eq.s32.totalorder %s20, 0
    %p62 = por %p60, %p61
    %p63 = scmp.ne.s32.totalorder %s51, %s52
    %p64 = scmp.eq.s32.totalorder %s21, 1
    %p65 = por %p63, %p64
    %p67 = scmp.ne.s32.totalorder %s52, %s66
    %p68 = scmp.eq.s32.totalorder %s21, 0
    %p69 = por %p67, %p68
    %s71 = sadd.s32 %s70, 1
    %p74 = scmp.eq.s32.totalorder %s15, 1
    %p75 = scmp.ne.s32.totalorder %s70, %s72
    %p76 = scmp.eq.s32.totalorder %s15, 0
    %p77 = por %p75, %p76
    %p78 = scmp.ne.s32.totalorder %s70, %s72
    %p79 = scmp.eq.s32.totalorder %s20, 1
    %p80 = por %p78, %p79
    %p81 = scmp.ne.s32.totalorder %s72, %s73
    %p82 = scmp.eq.s32.totalorder %s20, 0
    %p83 = por %p81, %p82
    %p84 = scmp.ne.s32.totalorder %s72, %s73
    %p85 = scmp.eq.s32.totalorder %s21, 1
    %p86 = por %p84, %p85
    %p88 = scmp.ne.s32.totalorder %s73, %s87
    %p89 = scmp.eq.s32.totalorder %s21, 0
    %p90 = por %p88, %p89
    %s92 = sadd.s32 %s91, 1
    %p95 = scmp.eq.s32.totalorder %s15, 1
    %p96 = scmp.ne.s32.totalorder %s91, %s93
    %p97 = scmp.eq.s32.totalorder %s15, 0
    %p98 = por %p96, %p97
    %p99 = scmp.ne.s32.totalorder %s91, %s93
    %p100 = scmp.eq.s32.totalorder %s20, 1
    %p101 = por %p99, %p100
    %p102 = scmp.ne.s32.totalorder %s93, %s94
    %p103 = scmp.eq.s32.totalorder %s20, 0
    %p104 = por %p102, %p103
    %p105 = scmp.ne.s32.totalorder %s93, %s94
    %p106 = scmp.eq.s32.totalorder %s21, 1
    %p107 = por %p105, %p106
    %p109 = scmp.ne.s32.totalorder %s94, %s108
    %p110 = scmp.eq.s32.totalorder %s21, 0
    %p111 = por %p109, %p110
    %s113 = sadd.s32 %s112, 1
    %p116 = scmp.eq.s32.totalorder %s15, 1
    %p117 = scmp.ne.s32.totalorder %s112, %s114
    %p118 = scmp.eq.s32.totalorder %s15, 0
    %p119 = por %p117, %p118
    %p120 = scmp.ne.s32.totalorder %s112, %s114
    %p121 = scmp.eq.s32.totalorder %s20, 1
    %p122 = por %p120, %p121
    %p123 = scmp.ne.s32.totalorder %s114, %s115
    %p124 = scmp.eq.s32.totalorder %s20, 0
    %p125 = por %p123, %p124
    %p126 = scmp.ne.s32.totalorder %s114, %s115
    %p127 = scmp.eq.s32.totalorder %s21, 1
    %p128 = por %p126, %p127
    %p130 = scmp.ne.s32.totalorder %s115, %s129
    %p131 = scmp.eq.s32.totalorder %s21, 0
    %p132 = por %p130, %p131
    %s134 = sadd.s32 %s133, 1
    %p137 = scmp.eq.s32.totalorder %s15, 1
    %p138 = scmp.ne.s32.totalorder %s133, %s135
    %p139 = scmp.eq.s32.totalorder %s15, 0
    %p140 = por %p138, %p139
    %p141 = scmp.ne.s32.totalorder %s133, %s135
    %p142 = scmp.eq.s32.totalorder %s20, 1
    %p143 = por %p141, %p142
    %p144 = scmp.ne.s32.totalorder %s135, %s136
    %p145 = scmp.eq.s32.totalorder %s20, 0
    %p146 = por %p144, %p145
    %p147 = scmp.ne.s32.totalorder %s135, %s136
    %p148 = scmp.eq.s32.totalorder %s21, 1
    %p149 = por %p147, %p148
    %p151 = scmp.ne.s32.totalorder %s136, %s150
    %p152 = scmp.eq.s32.totalorder %s21, 0
    %p153 = por %p151, %p152
    %s155 = sadd.s32 %s154, 1
    %p158 = scmp.eq.s32.totalorder %s15, 1
    %p159 = scmp.ne.s32.totalorder %s154, %s156
    %p160 = scmp.eq.s32.totalorder %s15, 0
    %p161 = por %p159, %p160
    %p162 = scmp.ne.s32.totalorder %s154, %s156
    %p163 = scmp.eq.s32.totalorder %s20, 1
    %p164 = por %p162, %p163
    %p165 = scmp.ne.s32.totalorder %s156, %s157
    %p166 = scmp.eq.s32.totalorder %s20, 0
    %p167 = por %p165, %p166
    %p168 = scmp.ne.s32.totalorder %s156, %s157
    %p169 = scmp.eq.s32.totalorder %s21, 1
    %p170 = por %p168, %p169
    %p172 = scmp.ne.s32.totalorder %s157, %s171
    %p173 = scmp.eq.s32.totalorder %s21, 0
    %p174 = por %p172, %p173
    %s175 = ssub.s32 %s15, %s22
    %p176 = scmp.eq.s32.totalorder %s175, 0
    %s178 = sadd.s32 %s177, 1
    %s179 = scalar_select %p176, %s177, %s178
    %p182 = pneg %p176
    %p183 = scmp.eq.s32.totalorder %s15, 1
    %p184 = por %p182, %p183
    %p185 = scmp.ne.s32.totalorder %s177, %s180
    %p186 = scmp.eq.s32.totalorder %s15, 0
    %p187 = por %p185, %p186
    %p188 = scmp.ne.s32.totalorder %s177, %s180
    %p189 = scmp.eq.s32.totalorder %s20, 1
    %p190 = por %p188, %p189
    %p191 = scmp.ne.s32.totalorder %s180, %s181
    %p192 = scmp.eq.s32.totalorder %s20, 0
    %p193 = por %p191, %p192
    %p194 = scmp.ne.s32.totalorder %s180, %s181
    %p195 = scmp.eq.s32.totalorder %s21, 1
    %p196 = por %p194, %p195
    %p198 = scmp.ne.s32.totalorder %s181, %s197
    %p199 = scmp.eq.s32.totalorder %s21, 0
    %p200 = por %p198, %p199
    %s201 = ssub.s32 %s15, %s22
    %p202 = scmp.eq.s32.totalorder %s201, 0
    %s204 = sadd.s32 %s203, 1
    %s205 = scalar_select %p202, %s203, %s204
    %p208 = pneg %p202
    %p209 = scmp.eq.s32.totalorder %s15, 1
    %p210 = por %p208, %p209
    %p211 = scmp.ne.s32.totalorder %s203, %s206
    %p212 = scmp.eq.s32.totalorder %s15, 0
    %p213 = por %p211, %p212
    %p214 = scmp.ne.s32.totalorder %s203, %s206
    %p215 = scmp.eq.s32.totalorder %s20, 1
    %p216 = por %p214, %p215
    %p217 = scmp.ne.s32.totalorder %s206, %s207
    %p218 = scmp.eq.s32.totalorder %s20, 0
    %p219 = por %p217, %p218
    %p220 = scmp.ne.s32.totalorder %s206, %s207
    %p221 = scmp.eq.s32.totalorder %s21, 1
    %p222 = por %p220, %p221
    %p224 = scmp.ne.s32.totalorder %s207, %s223
    %p225 = scmp.eq.s32.totalorder %s21, 0
    %p226 = por %p224, %p225
    %p227 = scmp.le.s32.totalorder 1, %s15
    %p228 = scmp.lt.s32.totalorder %s15, 3
    %p229 = pnand %p227, %p228
    %p230 = pneg %p229
    // Predicated region
    $region9: #{nonlinear_classifier_forward.1} parent=5 // pred_check
      _
    $region10: #{nonlinear_classifier_forward.1} parent=5 // pred_check_branch
      %232 = sbr.rel (%p229) target = $region12
    $region11: #{nonlinear_classifier_forward.1} parent=5 // pred_region
      %s233 = ssub.s32 %s15, 1
      // Predicated region
      $region13: #{nonlinear_classifier_forward.1} parent=11 // pred_check
        %p234 = pneg %p62
      $region14: #{nonlinear_classifier_forward.1} parent=11 // pred_check_branch
        %236 = sbr.rel (%p234) target = $region16
      $region15: #{nonlinear_classifier_forward.1} parent=11 // pred_region
        _
      $region16: #{nonlinear_classifier_forward.1} parent=11 // pred_fallthru
        _
      // Predicated region
      $region17: #{nonlinear_classifier_forward.1} parent=11 // pred_check
        %p237 = pneg %p83
      $region18: #{nonlinear_classifier_forward.1} parent=11 // pred_check_branch
        %239 = sbr.rel (%p237) target = $region20
      $region19: #{nonlinear_classifier_forward.1} parent=11 // pred_region
        _
      $region20: #{nonlinear_classifier_forward.1} parent=11 // pred_fallthru
        _
      // Predicated region
      $region21: #{nonlinear_classifier_forward.1} parent=11 // pred_check
        %p240 = pneg %p104
      $region22: #{nonlinear_classifier_forward.1} parent=11 // pred_check_branch
        %242 = sbr.rel (%p240) target = $region24
      $region23: #{nonlinear_classifier_forward.1} parent=11 // pred_region
        _
      $region24: #{nonlinear_classifier_forward.1} parent=11 // pred_fallthru
        _
      // Predicated region
      $region25: #{nonlinear_classifier_forward.1} parent=11 // pred_check
        %p243 = pneg %p125
      $region26: #{nonlinear_classifier_forward.1} parent=11 // pred_check_branch
        %245 = sbr.rel (%p243) target = $region28
      $region27: #{nonlinear_classifier_forward.1} parent=11 // pred_region
        _
      $region28: #{nonlinear_classifier_forward.1} parent=11 // pred_fallthru
        _
      // Predicated region
      $region29: #{nonlinear_classifier_forward.1} parent=11 // pred_check
        %p246 = pneg %p146
      $region30: #{nonlinear_classifier_forward.1} parent=11 // pred_check_branch
        %248 = sbr.rel (%p246) target = $region32
      $region31: #{nonlinear_classifier_forward.1} parent=11 // pred_region
        _
      $region32: #{nonlinear_classifier_forward.1} parent=11 // pred_fallthru
        _
      // Predicated region
      $region33: #{nonlinear_classifier_forward.1} parent=11 // pred_check
        %p249 = pneg %p167
      $region34: #{nonlinear_classifier_forward.1} parent=11 // pred_check_branch
        %251 = sbr.rel (%p249) target = $region36
      $region35: #{nonlinear_classifier_forward.1} parent=11 // pred_region
        _
      $region36: #{nonlinear_classifier_forward.1} parent=11 // pred_fallthru
        _
    $region12: #{nonlinear_classifier_forward.1} parent=5 // pred_fallthru
      _
    %p252 = scmp.lt.s32.totalorder %s15, 2
    // Predicated region
    $region37: #{nonlinear_classifier_forward.1} parent=5 // pred_check
      %p253 = pneg %p252
    $region38: #{nonlinear_classifier_forward.1} parent=5 // pred_check_branch
      %255 = sbr.rel (%p253) target = $region40
    $region39: #{nonlinear_classifier_forward.1} parent=5 // pred_region
      // Predicated region
      $region41: #{nonlinear_classifier_forward.1} parent=39 // pred_check
        %p256 = pneg %p35
      $region42: #{nonlinear_classifier_forward.1} parent=39 // pred_check_branch
        %258 = sbr.rel (%p256) target = $region44
      $region43: #{nonlinear_classifier_forward.1} parent=39 // pred_region
        %s259 = smul.u32 16, %s15
        %p260 = scmp.lt.s32.totalorder %s259, 31
        %s261 = scalar_select %p260, %s259, 31
        %s262 = smul.addr %s261, 2
        %s263 = smul.addr %s262, 4
        %s264 = scalar_lea.vmem %s0, %s263
        %s265 = smul.u32 16, %s15
      $region44: #{nonlinear_classifier_forward.1} parent=39 // pred_fallthru
        _
    $region40: #{nonlinear_classifier_forward.1} parent=5 // pred_fallthru
      _
    %p266 = scmp.le.s32.totalorder 1, %s15
    %p267 = scmp.lt.s32.totalorder %s15, 3
    %p268 = pnand %p266, %p267
    %p269 = pneg %p268
    // Predicated region
    $region45: #{nonlinear_classifier_forward.1} parent=5 // pred_check
      _
    $region46: #{nonlinear_classifier_forward.1} parent=5 // pred_check_branch
      %271 = sbr.rel (%p268) target = $region48
    $region47: #{nonlinear_classifier_forward.1} parent=5 // pred_region
      %s272 = ssub.s32 %s15, 1
      %s273 = smul.u32 16, %s20
      %p274 = scmp.lt.s32.totalorder %s273, 31
      %s275 = scalar_select %p274, %s273, 31
      %s276 = smul.addr %s275, 2
      %s277 = smul.addr %s276, 4
      %s278 = scalar_lea.vmem %s0, %s277
      %p279 = pneg %p41
      %p280 = pneg %p38
      %p281 = pneg %p62
      %p282 = pneg %p59
      %p283 = pneg %p83
      %p284 = pneg %p80
      %p285 = pneg %p104
      %p286 = pneg %p101
      %p287 = pneg %p125
      %p288 = pneg %p122
      %p289 = pneg %p146
      %p290 = pneg %p143
      %p291 = pneg %p167
      %p292 = pneg %p164
      %p293 = pneg %p193
      %p294 = pneg %p190
      %s295 = smul.u32 16, %s20
      %p296 = scmp.lt.s32.totalorder %s295, 31
      %s297 = scalar_select %p296, %s295, 31
      %s298 = smul.addr %s297, 8
      %s299 = scalar_lea.vmem %s7, %s298
      %p300 = pneg %p219
      %p301 = pneg %p216
      %s302 = smul.u32 16, %s20
      %p303 = scmp.lt.s32.totalorder %s302, 31
      %s304 = scalar_select %p303, %s302, 31
      %s305 = smul.addr %s304, 8
      %s306 = scalar_lea.vmem %s8, %s305
      %s307 = smul.u32 16, %s20
      %p308 = scmp.lt.s32.totalorder %s307, 31
      %s309 = scalar_select %p308, %s307, 31
      %s310 = smul.addr %s309, 2
      %s311 = smul.addr %s310, 4
      %s312 = scalar_lea.vmem %s0, %s311
      %s313 = smul.u32 16, %s20
      %s314 = smul.u32 16, %s20
      %p315 = scmp.lt.s32.totalorder %s314, 31
      %s316 = scalar_select %p315, %s314, 31
      %s317 = smul.addr %s316, 8
      %s318 = scalar_lea.vmem %s7, %s317
      %s319 = smul.u32 16, %s20
      %s320 = smul.u32 16, %s20
      %p321 = scmp.lt.s32.totalorder %s320, 31
      %s322 = scalar_select %p321, %s320, 31
      %s323 = smul.addr %s322, 8
      %s324 = scalar_lea.vmem %s8, %s323
      %s325 = smul.u32 16, %s20
      %v327 = vld [vmem:[%s312] sm:$0xff]
      %v328 = vld [vmem:[%s312 + $0x8] sm:$0xff]
      %v329 = vld [vmem:[%s312 + $0x10] sm:$0xff]
      %v330 = vld [vmem:[%s312 + $0x18] sm:$0xff]
      %v331 = vld [vmem:[%s312 + $0x20] sm:$0xff]
      %v332 = vld [vmem:[%s312 + $0x28] sm:$0xff]
      %v333 = vld [vmem:[%s312 + $0x30] sm:$0xff]
      %v334 = vld [vmem:[%s312 + $0x38] sm:$0xff]
      %v335 = vld [vmem:[%s312 + $0x40] sm:$0xff]
      %v336 = vld [vmem:[%s312 + $0x48] sm:$0xff]
      %v337 = vld [vmem:[%s312 + $0x50] sm:$0xff]
      %v338 = vld [vmem:[%s312 + $0x58] sm:$0xff]
      %v339 = vld [vmem:[%s312 + $0x60] sm:$0xff]
      %v340 = vld [vmem:[%s312 + $0x68] sm:$0xff]
      %v341 = vld [vmem:[%s312 + $0x70] sm:$0xff]
      %v342 = vld [vmem:[%s312 + $0x78] sm:$0xff]
      %v343 = vld [vmem:[%s1] sm:$0xff]
      %v344 = vld [vmem:[%s1 + $0x8] sm:$0xff]
      %v345 = vld [vmem:[%s1 + $0x10] sm:$0xff]
      %v346 = vld [vmem:[%s1 + $0x18] sm:$0xff]
      %v347 = vld [vmem:[%s1 + $0x20] sm:$0xff]
      %v348 = vld [vmem:[%s1 + $0x28] sm:$0xff]
      %v349 = vld [vmem:[%s1 + $0x30] sm:$0xff]
      %v350 = vld [vmem:[%s1 + $0x38] sm:$0xff]
      %v351 = vld [vmem:[%s1 + $0x40] sm:$0xff]
      %v352 = vld [vmem:[%s1 + $0x48] sm:$0xff]
      %v353 = vld [vmem:[%s1 + $0x50] sm:$0xff]
      %v354 = vld [vmem:[%s1 + $0x58] sm:$0xff]
      %v355 = vld [vmem:[%s1 + $0x60] sm:$0xff]
      %v356 = vld [vmem:[%s1 + $0x68] sm:$0xff]
      %v357 = vld [vmem:[%s1 + $0x70] sm:$0xff]
      %v358 = vld [vmem:[%s1 + $0x78] sm:$0xff]
      %v359 = vld [vmem:[%s1 + $0x80] sm:$0xff]
      %v360 = vld [vmem:[%s1 + $0x88] sm:$0xff]
      %v361 = vld [vmem:[%s1 + $0x90] sm:$0xff]
      %v362 = vld [vmem:[%s1 + $0x98] sm:$0xff]
      %v363 = vld [vmem:[%s1 + $0xa0] sm:$0xff]
      %v364 = vld [vmem:[%s1 + $0xa8] sm:$0xff]
      %v365 = vld [vmem:[%s1 + $0xb0] sm:$0xff]
      %v366 = vld [vmem:[%s1 + $0xb8] sm:$0xff]
      %v367 = vld [vmem:[%s1 + $0xc0] sm:$0xff]
      %v368 = vld [vmem:[%s1 + $0xc8] sm:$0xff]
      %v369 = vld [vmem:[%s1 + $0xd0] sm:$0xff]
      %v370 = vld [vmem:[%s1 + $0xd8] sm:$0xff]
      %v371 = vld [vmem:[%s1 + $0xe0] sm:$0xff]
      %v372 = vld [vmem:[%s1 + $0xe8] sm:$0xff]
      %v373 = vld [vmem:[%s1 + $0xf0] sm:$0xff]
      %v374 = vld [vmem:[%s1 + $0xf8] sm:$0xff]
      %v375 = vld [vmem:[%s1 + $0x100] sm:$0xff]
      %v376 = vld [vmem:[%s1 + $0x108] sm:$0xff]
      %v377 = vld [vmem:[%s1 + $0x110] sm:$0xff]
      %v378 = vld [vmem:[%s1 + $0x118] sm:$0xff]
      %v379 = vld [vmem:[%s1 + $0x120] sm:$0xff]
      %v380 = vld [vmem:[%s1 + $0x128] sm:$0xff]
      %v381 = vld [vmem:[%s1 + $0x130] sm:$0xff]
      %v382 = vld [vmem:[%s1 + $0x138] sm:$0xff]
      %v383 = vld [vmem:[%s1 + $0x140] sm:$0xff]
      %v384 = vld [vmem:[%s1 + $0x148] sm:$0xff]
      %v385 = vld [vmem:[%s1 + $0x150] sm:$0xff]
      %v386 = vld [vmem:[%s1 + $0x158] sm:$0xff]
      %v387 = vld [vmem:[%s1 + $0x160] sm:$0xff]
      %v388 = vld [vmem:[%s1 + $0x168] sm:$0xff]
      %v389 = vld [vmem:[%s1 + $0x170] sm:$0xff]
      %v390 = vld [vmem:[%s1 + $0x178] sm:$0xff]
      %v391 = vld [vmem:[%s1 + $0x180] sm:$0xff]
      %v392 = vld [vmem:[%s1 + $0x188] sm:$0xff]
      %v393 = vld [vmem:[%s1 + $0x190] sm:$0xff]
      %v394 = vld [vmem:[%s1 + $0x198] sm:$0xff]
      %v395 = vld [vmem:[%s1 + $0x1a0] sm:$0xff]
      %v396 = vld [vmem:[%s1 + $0x1a8] sm:$0xff]
      %v397 = vld [vmem:[%s1 + $0x1b0] sm:$0xff]
      %v398 = vld [vmem:[%s1 + $0x1b8] sm:$0xff]
      %v399 = vld [vmem:[%s1 + $0x1c0] sm:$0xff]
      %v400 = vld [vmem:[%s1 + $0x1c8] sm:$0xff]
      %v401 = vld [vmem:[%s1 + $0x1d0] sm:$0xff]
      %v402 = vld [vmem:[%s1 + $0x1d8] sm:$0xff]
      %v403 = vld [vmem:[%s1 + $0x1e0] sm:$0xff]
      %v404 = vld [vmem:[%s1 + $0x1e8] sm:$0xff]
      %v405 = vld [vmem:[%s1 + $0x1f0] sm:$0xff]
      %v406 = vld [vmem:[%s1 + $0x1f8] sm:$0xff]
      %v407 = vld [vmem:[%s2] sm:$0xf]
      %v409 = vlaneseq
      %v410 = vshrl.u32 %v409, 7
      %v411 = vsub.s32 0, %v410
      %v412 = vrot.slane %v407, %v411
      %v413 = vlaneseq
      %v414 = vshrl.u32 %v413, 7
      %v415 = vsub.s32 1, %v414
      %v416 = vrot.slane %v407, %v415
      %v417 = vlaneseq
      %v418 = vshrl.u32 %v417, 7
      %v419 = vsub.s32 2, %v418
      %v420 = vrot.slane %v407, %v419
      %v421 = vlaneseq
      %v422 = vshrl.u32 %v421, 7
      %v423 = vsub.s32 3, %v422
      %v424 = vrot.slane %v407, %v423
      %v445 = vunpack.c.l.b16 %v327
      %v446 = vunpack.c.h.b16 %v327
      %v447 = vunpack.c.l.b16 %v328
      %v448 = vunpack.c.h.b16 %v328
      %v449 = vunpack.c.l.b16 %v329
      %v450 = vunpack.c.h.b16 %v329
      %v451 = vunpack.c.l.b16 %v330
      %v452 = vunpack.c.h.b16 %v330
      %v453 = vunpack.c.l.b16 %v331
      %v454 = vunpack.c.h.b16 %v331
      %v455 = vunpack.c.l.b16 %v332
      %v456 = vunpack.c.h.b16 %v332
      %v457 = vunpack.c.l.b16 %v333
      %v458 = vunpack.c.h.b16 %v333
      %v459 = vunpack.c.l.b16 %v334
      %v460 = vunpack.c.h.b16 %v334
      %v461 = vunpack.c.l.b16 %v335
      %v462 = vunpack.c.h.b16 %v335
      %v463 = vunpack.c.l.b16 %v336
      %v464 = vunpack.c.h.b16 %v336
      %v465 = vunpack.c.l.b16 %v337
      %v466 = vunpack.c.h.b16 %v337
      %v467 = vunpack.c.l.b16 %v338
      %v468 = vunpack.c.h.b16 %v338
      %v469 = vunpack.c.l.b16 %v339
      %v470 = vunpack.c.h.b16 %v339
      %v471 = vunpack.c.l.b16 %v340
      %v472 = vunpack.c.h.b16 %v340
      %v473 = vunpack.c.l.b16 %v341
      %v474 = vunpack.c.h.b16 %v341
      %v475 = vunpack.c.l.b16 %v342
      %v476 = vunpack.c.h.b16 %v342
      %v477 = vpack.c.b16 %v447, %v445
      %v478 = vpack.c.b16 %v448, %v446
      %v479 = vpack.c.b16 %v451, %v449
      %v480 = vpack.c.b16 %v452, %v450
      %v481 = vpack.c.b16 %v455, %v453
      %v482 = vpack.c.b16 %v456, %v454
      %v483 = vpack.c.b16 %v459, %v457
      %v484 = vpack.c.b16 %v460, %v458
      %v485 = vpack.c.b16 %v463, %v461
      %v486 = vpack.c.b16 %v464, %v462
      %v487 = vpack.c.b16 %v467, %v465
      %v488 = vpack.c.b16 %v468, %v466
      %v489 = vpack.c.b16 %v471, %v469
      %v490 = vpack.c.b16 %v472, %v470
      %v491 = vpack.c.b16 %v475, %v473
      %v492 = vpack.c.b16 %v476, %v474
      %v573 = vunpack.c.l.b16 %v343
      %v574 = vunpack.c.h.b16 %v343
      %v575 = vunpack.c.l.b16 %v344
      %v576 = vunpack.c.h.b16 %v344
      %v577 = vunpack.c.l.b16 %v345
      %v578 = vunpack.c.h.b16 %v345
      %v579 = vunpack.c.l.b16 %v346
      %v580 = vunpack.c.h.b16 %v346
      %v581 = vunpack.c.l.b16 %v347
      %v582 = vunpack.c.h.b16 %v347
      %v583 = vunpack.c.l.b16 %v348
      %v584 = vunpack.c.h.b16 %v348
      %v585 = vunpack.c.l.b16 %v349
      %v586 = vunpack.c.h.b16 %v349
      %v587 = vunpack.c.l.b16 %v350
      %v588 = vunpack.c.h.b16 %v350
      %v589 = vunpack.c.l.b16 %v351
      %v590 = vunpack.c.h.b16 %v351
      %v591 = vunpack.c.l.b16 %v352
      %v592 = vunpack.c.h.b16 %v352
      %v593 = vunpack.c.l.b16 %v353
      %v594 = vunpack.c.h.b16 %v353
      %v595 = vunpack.c.l.b16 %v354
      %v596 = vunpack.c.h.b16 %v354
      %v597 = vunpack.c.l.b16 %v355
      %v598 = vunpack.c.h.b16 %v355
      %v599 = vunpack.c.l.b16 %v356
      %v600 = vunpack.c.h.b16 %v356
      %v601 = vunpack.c.l.b16 %v357
      %v602 = vunpack.c.h.b16 %v357
      %v603 = vunpack.c.l.b16 %v358
      %v604 = vunpack.c.h.b16 %v358
      %v605 = vunpack.c.l.b16 %v359
      %v606 = vunpack.c.h.b16 %v359
      %v607 = vunpack.c.l.b16 %v360
      %v608 = vunpack.c.h.b16 %v360
      %v609 = vunpack.c.l.b16 %v361
      %v610 = vunpack.c.h.b16 %v361
      %v611 = vunpack.c.l.b16 %v362
      %v612 = vunpack.c.h.b16 %v362
      %v613 = vunpack.c.l.b16 %v363
      %v614 = vunpack.c.h.b16 %v363
      %v615 = vunpack.c.l.b16 %v364
      %v616 = vunpack.c.h.b16 %v364
      %v617 = vunpack.c.l.b16 %v365
      %v618 = vunpack.c.h.b16 %v365
      %v619 = vunpack.c.l.b16 %v366
      %v620 = vunpack.c.h.b16 %v366
      %v621 = vunpack.c.l.b16 %v367
      %v622 = vunpack.c.h.b16 %v367
      %v623 = vunpack.c.l.b16 %v368
      %v624 = vunpack.c.h.b16 %v368
      %v625 = vunpack.c.l.b16 %v369
      %v626 = vunpack.c.h.b16 %v369
      %v627 = vunpack.c.l.b16 %v370
      %v628 = vunpack.c.h.b16 %v370
      %v629 = vunpack.c.l.b16 %v371
      %v630 = vunpack.c.h.b16 %v371
      %v631 = vunpack.c.l.b16 %v372
      %v632 = vunpack.c.h.b16 %v372
      %v633 = vunpack.c.l.b16 %v373
      %v634 = vunpack.c.h.b16 %v373
      %v635 = vunpack.c.l.b16 %v374
      %v636 = vunpack.c.h.b16 %v374
      %v637 = vunpack.c.l.b16 %v375
      %v638 = vunpack.c.h.b16 %v375
      %v639 = vunpack.c.l.b16 %v376
      %v640 = vunpack.c.h.b16 %v376
      %v641 = vunpack.c.l.b16 %v377
      %v642 = vunpack.c.h.b16 %v377
      %v643 = vunpack.c.l.b16 %v378
      %v644 = vunpack.c.h.b16 %v378
      %v645 = vunpack.c.l.b16 %v379
      %v646 = vunpack.c.h.b16 %v379
      %v647 = vunpack.c.l.b16 %v380
      %v648 = vunpack.c.h.b16 %v380
      %v649 = vunpack.c.l.b16 %v381
      %v650 = vunpack.c.h.b16 %v381
      %v651 = vunpack.c.l.b16 %v382
      %v652 = vunpack.c.h.b16 %v382
      %v653 = vunpack.c.l.b16 %v383
      %v654 = vunpack.c.h.b16 %v383
      %v655 = vunpack.c.l.b16 %v384
      %v656 = vunpack.c.h.b16 %v384
      %v657 = vunpack.c.l.b16 %v385
      %v658 = vunpack.c.h.b16 %v385
      %v659 = vunpack.c.l.b16 %v386
      %v660 = vunpack.c.h.b16 %v386
      %v661 = vunpack.c.l.b16 %v387
      %v662 = vunpack.c.h.b16 %v387
      %v663 = vunpack.c.l.b16 %v388
      %v664 = vunpack.c.h.b16 %v388
      %v665 = vunpack.c.l.b16 %v389
      %v666 = vunpack.c.h.b16 %v389
      %v667 = vunpack.c.l.b16 %v390
      %v668 = vunpack.c.h.b16 %v390
      %v669 = vunpack.c.l.b16 %v391
      %v670 = vunpack.c.h.b16 %v391
      %v671 = vunpack.c.l.b16 %v392
      %v672 = vunpack.c.h.b16 %v392
      %v673 = vunpack.c.l.b16 %v393
      %v674 = vunpack.c.h.b16 %v393
      %v675 = vunpack.c.l.b16 %v394
      %v676 = vunpack.c.h.b16 %v394
      %v677 = vunpack.c.l.b16 %v395
      %v678 = vunpack.c.h.b16 %v395
      %v679 = vunpack.c.l.b16 %v396
      %v680 = vunpack.c.h.b16 %v396
      %v681 = vunpack.c.l.b16 %v397
      %v682 = vunpack.c.h.b16 %v397
      %v683 = vunpack.c.l.b16 %v398
      %v684 = vunpack.c.h.b16 %v398
      %v685 = vunpack.c.l.b16 %v399
      %v686 = vunpack.c.h.b16 %v399
      %v687 = vunpack.c.l.b16 %v400
      %v688 = vunpack.c.h.b16 %v400
      %v689 = vunpack.c.l.b16 %v401
      %v690 = vunpack.c.h.b16 %v401
      %v691 = vunpack.c.l.b16 %v402
      %v692 = vunpack.c.h.b16 %v402
      %v693 = vunpack.c.l.b16 %v403
      %v694 = vunpack.c.h.b16 %v403
      %v695 = vunpack.c.l.b16 %v404
      %v696 = vunpack.c.h.b16 %v404
      %v697 = vunpack.c.l.b16 %v405
      %v698 = vunpack.c.h.b16 %v405
      %v699 = vunpack.c.l.b16 %v406
      %v700 = vunpack.c.h.b16 %v406
      %v701 = vpack.c.b16 %v577, %v573
      %v702 = vpack.c.b16 %v578, %v574
      %v703 = vpack.c.b16 %v579, %v575
      %v704 = vpack.c.b16 %v580, %v576
      %v705 = vpack.c.b16 %v585, %v581
      %v706 = vpack.c.b16 %v586, %v582
      %v707 = vpack.c.b16 %v587, %v583
      %v708 = vpack.c.b16 %v588, %v584
      %v709 = vpack.c.b16 %v593, %v589
      %v710 = vpack.c.b16 %v594, %v590
      %v711 = vpack.c.b16 %v595, %v591
      %v712 = vpack.c.b16 %v596, %v592
      %v713 = vpack.c.b16 %v601, %v597
      %v714 = vpack.c.b16 %v602, %v598
      %v715 = vpack.c.b16 %v603, %v599
      %v716 = vpack.c.b16 %v604, %v600
      %v717 = vpack.c.b16 %v609, %v605
      %v718 = vpack.c.b16 %v610, %v606
      %v719 = vpack.c.b16 %v611, %v607
      %v720 = vpack.c.b16 %v612, %v608
      %v721 = vpack.c.b16 %v617, %v613
      %v722 = vpack.c.b16 %v618, %v614
      %v723 = vpack.c.b16 %v619, %v615
      %v724 = vpack.c.b16 %v620, %v616
      %v725 = vpack.c.b16 %v625, %v621
      %v726 = vpack.c.b16 %v626, %v622
      %v727 = vpack.c.b16 %v627, %v623
      %v728 = vpack.c.b16 %v628, %v624
      %v729 = vpack.c.b16 %v633, %v629
      %v730 = vpack.c.b16 %v634, %v630
      %v731 = vpack.c.b16 %v635, %v631
      %v732 = vpack.c.b16 %v636, %v632
      %v733 = vpack.c.b16 %v641, %v637
      %v734 = vpack.c.b16 %v642, %v638
      %v735 = vpack.c.b16 %v643, %v639
      %v736 = vpack.c.b16 %v644, %v640
      %v737 = vpack.c.b16 %v649, %v645
      %v738 = vpack.c.b16 %v650, %v646
      %v739 = vpack.c.b16 %v651, %v647
      %v740 = vpack.c.b16 %v652, %v648
      %v741 = vpack.c.b16 %v657, %v653
      %v742 = vpack.c.b16 %v658, %v654
      %v743 = vpack.c.b16 %v659, %v655
      %v744 = vpack.c.b16 %v660, %v656
      %v745 = vpack.c.b16 %v665, %v661
      %v746 = vpack.c.b16 %v666, %v662
      %v747 = vpack.c.b16 %v667, %v663
      %v748 = vpack.c.b16 %v668, %v664
      %v749 = vpack.c.b16 %v673, %v669
      %v750 = vpack.c.b16 %v674, %v670
      %v751 = vpack.c.b16 %v675, %v671
      %v752 = vpack.c.b16 %v676, %v672
      %v753 = vpack.c.b16 %v681, %v677
      %v754 = vpack.c.b16 %v682, %v678
      %v755 = vpack.c.b16 %v683, %v679
      %v756 = vpack.c.b16 %v684, %v680
      %v757 = vpack.c.b16 %v689, %v685
      %v758 = vpack.c.b16 %v690, %v686
      %v759 = vpack.c.b16 %v691, %v687
      %v760 = vpack.c.b16 %v692, %v688
      %v761 = vpack.c.b16 %v697, %v693
      %v762 = vpack.c.b16 %v698, %v694
      %v763 = vpack.c.b16 %v699, %v695
      %v764 = vpack.c.b16 %v700, %v696
      %829 = vmatprep.subr.bf16.mxu0 %v702
      %830 = vmatpush1.bf16.msra.mxu0 %v701
      %831 = vmatprep.subr.bf16.mxu0 %v706
      %832 = vmatpush1.bf16.msra.mxu0 %v705
      %833 = vmatprep.subr.bf16.mxu0 %v710
      %834 = vmatpush1.bf16.msra.mxu0 %v709
      %835 = vmatprep.subr.bf16.mxu0 %v714
      %836 = vmatpush1.bf16.msra.mxu0 %v713
      %837 = vmatprep.subr.bf16.mxu0 %v718
      %838 = vmatpush1.bf16.msra.mxu0 %v717
      %839 = vmatprep.subr.bf16.mxu0 %v722
      %840 = vmatpush1.bf16.msra.mxu0 %v721
      %841 = vmatprep.subr.bf16.mxu0 %v726
      %842 = vmatpush1.bf16.msra.mxu0 %v725
      %843 = vmatprep.subr.bf16.mxu0 %v730
      %844 = vmatpush1.bf16.msra.mxu0 %v729
      %845 = vmatprep.subr.bf16.mxu0 %v734
      %846 = vmatpush1.bf16.msra.mxu0 %v733
      %847 = vmatprep.subr.bf16.mxu0 %v738
      %848 = vmatpush1.bf16.msra.mxu0 %v737
      %849 = vmatprep.subr.bf16.mxu0 %v742
      %850 = vmatpush1.bf16.msra.mxu0 %v741
      %851 = vmatprep.subr.bf16.mxu0 %v746
      %852 = vmatpush1.bf16.msra.mxu0 %v745
      %853 = vmatprep.subr.bf16.mxu0 %v750
      %854 = vmatpush1.bf16.msra.mxu0 %v749
      %855 = vmatprep.subr.bf16.mxu0 %v754
      %856 = vmatpush1.bf16.msra.mxu0 %v753
      %857 = vmatprep.subr.bf16.mxu0 %v758
      %858 = vmatpush1.bf16.msra.mxu0 %v757
      %859 = vmatprep.subr.bf16.mxu0 %v762
      %860 = vmatpush1.bf16.msra.mxu0 %v761
      %861 = vmatprep.mubr.bf16.mxu0 %v478
      %862 = vmatmul.mubr.bf16.gmra.mrb[0].mxu0 %v477
      %v863 = vpop.f32.mrb[0].mxu0
      %v864 = vadd.f32 %v412, %v863
      %v865 = vpop.f32.mrb[0].mxu0
      %v866 = vadd.f32 %v416, %v865
      %v867 = vpop.f32.mrb[0].mxu0
      %v868 = vadd.f32 %v412, %v867
      %v869 = vpop.f32.mrb[0].mxu0
      %v870 = vadd.f32 %v416, %v869
      %871 = vmatprep.mubr.bf16.mxu0 %v480
      %872 = vmatmul.mubr.bf16.gmra.mrb[0].mxu0 %v479
      %v873 = vpop.f32.mrb[0].mxu0
      %v874 = vadd.f32 %v412, %v873
      %v875 = vpop.f32.mrb[0].mxu0
      %v876 = vadd.f32 %v416, %v875
      %v877 = vpop.f32.mrb[0].mxu0
      %v878 = vadd.f32 %v412, %v877
      %v879 = vpop.f32.mrb[0].mxu0
      %v880 = vadd.f32 %v416, %v879
      %881 = vmatprep.mubr.bf16.mxu0 %v482
      %882 = vmatmul.mubr.bf16.gmra.mrb[0].mxu0 %v481
      %v883 = vpop.f32.mrb[0].mxu0
      %v884 = vadd.f32 %v412, %v883
      %v885 = vpop.f32.mrb[0].mxu0
      %v886 = vadd.f32 %v416, %v885
      %v887 = vpop.f32.mrb[0].mxu0
      %v888 = vadd.f32 %v412, %v887
      %v889 = vpop.f32.mrb[0].mxu0
      %v890 = vadd.f32 %v416, %v889
      %891 = vmatprep.mubr.bf16.mxu0 %v484
      %892 = vmatmul.mubr.bf16.gmra.mrb[0].mxu0 %v483
      %v893 = vpop.f32.mrb[0].mxu0
      %v894 = vadd.f32 %v412, %v893
      %v895 = vpop.f32.mrb[0].mxu0
      %v896 = vadd.f32 %v416, %v895
      %v897 = vpop.f32.mrb[0].mxu0
      %v898 = vadd.f32 %v412, %v897
      %v899 = vpop.f32.mrb[0].mxu0
      %v900 = vadd.f32 %v416, %v899
      %901 = vmatprep.mubr.bf16.mxu0 %v486
      %902 = vmatmul.mubr.bf16.gmra.mrb[0].mxu0 %v485
      %v903 = vpop.f32.mrb[0].mxu0
      %v904 = vadd.f32 %v412, %v903
      %v905 = vpop.f32.mrb[0].mxu0
      %v906 = vadd.f32 %v416, %v905
      %v907 = vpop.f32.mrb[0].mxu0
      %v908 = vadd.f32 %v412, %v907
      %v909 = vpop.f32.mrb[0].mxu0
      %v910 = vadd.f32 %v416, %v909
      %911 = vmatprep.mubr.bf16.mxu0 %v488
      %912 = vmatmul.mubr.bf16.gmra.mrb[0].mxu0 %v487
      %v913 = vpop.f32.mrb[0].mxu0
      %v914 = vadd.f32 %v412, %v913
      %v915 = vpop.f32.mrb[0].mxu0
      %v916 = vadd.f32 %v416, %v915
      %v917 = vpop.f32.mrb[0].mxu0
      %v918 = vadd.f32 %v412, %v917
      %v919 = vpop.f32.mrb[0].mxu0
      %v920 = vadd.f32 %v416, %v919
      %921 = vmatprep.mubr.bf16.mxu0 %v490
      %922 = vmatmul.mubr.bf16.gmra.mrb[0].mxu0 %v489
      %v923 = vpop.f32.mrb[0].mxu0
      %v924 = vadd.f32 %v412, %v923
      %v925 = vpop.f32.mrb[0].mxu0
      %v926 = vadd.f32 %v416, %v925
      %v927 = vpop.f32.mrb[0].mxu0
      %v928 = vadd.f32 %v412, %v927
      %v929 = vpop.f32.mrb[0].mxu0
      %v930 = vadd.f32 %v416, %v929
      %931 = vmatprep.mubr.bf16.mxu0 %v492
      %932 = vmatmul.mubr.bf16.gmra.mrb[0].mxu0 %v491
      %v933 = vpop.f32.mrb[0].mxu0
      %v934 = vadd.f32 %v412, %v933
      %v935 = vpop.f32.mrb[0].mxu0
      %v936 = vadd.f32 %v416, %v935
      %v937 = vpop.f32.mrb[0].mxu0
      %v938 = vadd.f32 %v412, %v937
      %v939 = vpop.f32.mrb[0].mxu0
      %v940 = vadd.f32 %v416, %v939
      %941 = vdwg.mxu0
      %942 = vmatprep.subr.bf16.mxu0 %v704
      %943 = vmatpush1.bf16.msra.mxu0 %v703
      %944 = vmatprep.subr.bf16.mxu0 %v708
      %945 = vmatpush1.bf16.msra.mxu0 %v707
      %946 = vmatprep.subr.bf16.mxu0 %v712
      %947 = vmatpush1.bf16.msra.mxu0 %v711
      %948 = vmatprep.subr.bf16.mxu0 %v716
      %949 = vmatpush1.bf16.msra.mxu0 %v715
      %950 = vmatprep.subr.bf16.mxu0 %v720
      %951 = vmatpush1.bf16.msra.mxu0 %v719
      %952 = vmatprep.subr.bf16.mxu0 %v724
      %953 = vmatpush1.bf16.msra.mxu0 %v723
      %954 = vmatprep.subr.bf16.mxu0 %v728
      %955 = vmatpush1.bf16.msra.mxu0 %v727
      %956 = vmatprep.subr.bf16.mxu0 %v732
      %957 = vmatpush1.bf16.msra.mxu0 %v731
      %958 = vmatprep.subr.bf16.mxu0 %v736
      %959 = vmatpush1.bf16.msra.mxu0 %v735
      %960 = vmatprep.subr.bf16.mxu0 %v740
      %961 = vmatpush1.bf16.msra.mxu0 %v739
      %962 = vmatprep.subr.bf16.mxu0 %v744
      %963 = vmatpush1.bf16.msra.mxu0 %v743
      %964 = vmatprep.subr.bf16.mxu0 %v748
      %965 = vmatpush1.bf16.msra.mxu0 %v747
      %966 = vmatprep.subr.bf16.mxu0 %v752
      %967 = vmatpush1.bf16.msra.mxu0 %v751
      %968 = vmatprep.subr.bf16.mxu0 %v756
      %969 = vmatpush1.bf16.msra.mxu0 %v755
      %970 = vmatprep.subr.bf16.mxu0 %v760
      %971 = vmatpush1.bf16.msra.mxu0 %v759
      %972 = vmatprep.subr.bf16.mxu0 %v764
      %973 = vmatpush1.bf16.msra.mxu0 %v763
      %974 = vmatprep.mubr.bf16.mxu0 %v478
      %975 = vmatmul.mubr.bf16.gmra.mrb[0].mxu0 %v477
      %v976 = vpop.f32.mrb[0].mxu0
      %v977 = vadd.f32 %v420, %v976
      %v978 = vpop.f32.mrb[0].mxu0
      %v979 = vadd.f32 %v424, %v978
      %v980 = vpop.f32.mrb[0].mxu0
      %v981 = vadd.f32 %v420, %v980
      %v982 = vpop.f32.mrb[0].mxu0
      %v983 = vadd.f32 %v424, %v982
      %984 = vmatprep.mubr.bf16.mxu0 %v480
      %985 = vmatmul.mubr.bf16.gmra.mrb[0].mxu0 %v479
      %v986 = vpop.f32.mrb[0].mxu0
      %v987 = vadd.f32 %v420, %v986
      %v988 = vpop.f32.mrb[0].mxu0
      %v989 = vadd.f32 %v424, %v988
      %v990 = vpop.f32.mrb[0].mxu0
      %v991 = vadd.f32 %v420, %v990
      %v992 = vpop.f32.mrb[0].mxu0
      %v993 = vadd.f32 %v424, %v992
      %994 = vmatprep.mubr.bf16.mxu0 %v482
      %995 = vmatmul.mubr.bf16.gmra.mrb[0].mxu0 %v481
      %v996 = vpop.f32.mrb[0].mxu0
      %v997 = vadd.f32 %v420, %v996
      %v998 = vpop.f32.mrb[0].mxu0
      %v999 = vadd.f32 %v424, %v998
      %v1000 = vpop.f32.mrb[0].mxu0
      %v1001 = vadd.f32 %v420, %v1000
      %v1002 = vpop.f32.mrb[0].mxu0
      %v1003 = vadd.f32 %v424, %v1002
      %1004 = vmatprep.mubr.bf16.mxu0 %v484
      %1005 = vmatmul.mubr.bf16.gmra.mrb[0].mxu0 %v483
      %v1006 = vpop.f32.mrb[0].mxu0
      %v1007 = vadd.f32 %v420, %v1006
      %v1008 = vpop.f32.mrb[0].mxu0
      %v1009 = vadd.f32 %v424, %v1008
      %v1010 = vpop.f32.mrb[0].mxu0
      %v1011 = vadd.f32 %v420, %v1010
      %v1012 = vpop.f32.mrb[0].mxu0
      %v1013 = vadd.f32 %v424, %v1012
      %1014 = vmatprep.mubr.bf16.mxu0 %v486
      %1015 = vmatmul.mubr.bf16.gmra.mrb[0].mxu0 %v485
      %v1016 = vpop.f32.mrb[0].mxu0
      %v1017 = vadd.f32 %v420, %v1016
      %v1018 = vpop.f32.mrb[0].mxu0
      %v1019 = vadd.f32 %v424, %v1018
      %v1020 = vpop.f32.mrb[0].mxu0
      %v1021 = vadd.f32 %v420, %v1020
      %v1022 = vpop.f32.mrb[0].mxu0
      %v1023 = vadd.f32 %v424, %v1022
      %1024 = vmatprep.mubr.bf16.mxu0 %v488
      %1025 = vmatmul.mubr.bf16.gmra.mrb[0].mxu0 %v487
      %v1026 = vpop.f32.mrb[0].mxu0
      %v1027 = vadd.f32 %v420, %v1026
      %v1028 = vpop.f32.mrb[0].mxu0
      %v1029 = vadd.f32 %v424, %v1028
      %v1030 = vpop.f32.mrb[0].mxu0
      %v1031 = vadd.f32 %v420, %v1030
      %v1032 = vpop.f32.mrb[0].mxu0
      %v1033 = vadd.f32 %v424, %v1032
      %1034 = vmatprep.mubr.bf16.mxu0 %v490
      %1035 = vmatmul.mubr.bf16.gmra.mrb[0].mxu0 %v489
      %v1036 = vpop.f32.mrb[0].mxu0
      %v1037 = vadd.f32 %v420, %v1036
      %v1038 = vpop.f32.mrb[0].mxu0
      %v1039 = vadd.f32 %v424, %v1038
      %v1040 = vpop.f32.mrb[0].mxu0
      %v1041 = vadd.f32 %v420, %v1040
      %v1042 = vpop.f32.mrb[0].mxu0
      %v1043 = vadd.f32 %v424, %v1042
      %1044 = vmatprep.mubr.bf16.mxu0 %v492
      %1045 = vmatmul.mubr.bf16.gmra.mrb[0].mxu0 %v491
      %v1046 = vpop.f32.mrb[0].mxu0
      %v1047 = vadd.f32 %v420, %v1046
      %v1048 = vpop.f32.mrb[0].mxu0
      %v1049 = vadd.f32 %v424, %v1048
      %v1050 = vpop.f32.mrb[0].mxu0
      %v1051 = vadd.f32 %v420, %v1050
      %v1052 = vpop.f32.mrb[0].mxu0
      %v1053 = vadd.f32 %v424, %v1052
      %1054 = vdwg.mxu0
      %v1055 = vmax.f32 %v864, 0.0
      %v1056 = vmax.f32 %v866, 0.0
      %v1057 = vmax.f32 %v977, 0.0
      %v1058 = vmax.f32 %v979, 0.0
      %v1059 = vmax.f32 %v868, 0.0
      %v1060 = vmax.f32 %v870, 0.0
      %v1061 = vmax.f32 %v981, 0.0
      %v1062 = vmax.f32 %v983, 0.0
      %v1063 = vmax.f32 %v874, 0.0
      %v1064 = vmax.f32 %v876, 0.0
      %v1065 = vmax.f32 %v987, 0.0
      %v1066 = vmax.f32 %v989, 0.0
      %v1067 = vmax.f32 %v878, 0.0
      %v1068 = vmax.f32 %v880, 0.0
      %v1069 = vmax.f32 %v991, 0.0
      %v1070 = vmax.f32 %v993, 0.0
      %v1071 = vmax.f32 %v884, 0.0
      %v1072 = vmax.f32 %v886, 0.0
      %v1073 = vmax.f32 %v997, 0.0
      %v1074 = vmax.f32 %v999, 0.0
      %v1075 = vmax.f32 %v888, 0.0
      %v1076 = vmax.f32 %v890, 0.0
      %v1077 = vmax.f32 %v1001, 0.0
      %v1078 = vmax.f32 %v1003, 0.0
      %v1079 = vmax.f32 %v894, 0.0
      %v1080 = vmax.f32 %v896, 0.0
      %v1081 = vmax.f32 %v1007, 0.0
      %v1082 = vmax.f32 %v1009, 0.0
      %v1083 = vmax.f32 %v898, 0.0
      %v1084 = vmax.f32 %v900, 0.0
      %v1085 = vmax.f32 %v1011, 0.0
      %v1086 = vmax.f32 %v1013, 0.0
      %v1087 = vmax.f32 %v904, 0.0
      %v1088 = vmax.f32 %v906, 0.0
      %v1089 = vmax.f32 %v1017, 0.0
      %v1090 = vmax.f32 %v1019, 0.0
      %v1091 = vmax.f32 %v908, 0.0
      %v1092 = vmax.f32 %v910, 0.0
      %v1093 = vmax.f32 %v1021, 0.0
      %v1094 = vmax.f32 %v1023, 0.0
      %v1095 = vmax.f32 %v914, 0.0
      %v1096 = vmax.f32 %v916, 0.0
      %v1097 = vmax.f32 %v1027, 0.0
      %v1098 = vmax.f32 %v1029, 0.0
      %v1099 = vmax.f32 %v918, 0.0
      %v1100 = vmax.f32 %v920, 0.0
      %v1101 = vmax.f32 %v1031, 0.0
      %v1102 = vmax.f32 %v1033, 0.0
      %v1103 = vmax.f32 %v924, 0.0
      %v1104 = vmax.f32 %v926, 0.0
      %v1105 = vmax.f32 %v1037, 0.0
      %v1106 = vmax.f32 %v1039, 0.0
      %v1107 = vmax.f32 %v928, 0.0
      %v1108 = vmax.f32 %v930, 0.0
      %v1109 = vmax.f32 %v1041, 0.0
      %v1110 = vmax.f32 %v1043, 0.0
      %v1111 = vmax.f32 %v934, 0.0
      %v1112 = vmax.f32 %v936, 0.0
      %v1113 = vmax.f32 %v1047, 0.0
      %v1114 = vmax.f32 %v1049, 0.0
      %v1115 = vmax.f32 %v938, 0.0
      %v1116 = vmax.f32 %v940, 0.0
      %v1117 = vmax.f32 %v1051, 0.0
      %v1118 = vmax.f32 %v1053, 0.0
      %v1119 = vpack.c.bf16 %v1059, %v1055
      %v1120 = vpack.c.bf16 %v1060, %v1056
      %v1121 = vpack.c.bf16 %v1061, %v1057
      %v1122 = vpack.c.bf16 %v1062, %v1058
      %v1123 = vpack.c.bf16 %v1067, %v1063
      %v1124 = vpack.c.bf16 %v1068, %v1064
      %v1125 = vpack.c.bf16 %v1069, %v1065
      %v1126 = vpack.c.bf16 %v1070, %v1066
      %v1127 = vpack.c.bf16 %v1075, %v1071
      %v1128 = vpack.c.bf16 %v1076, %v1072
      %v1129 = vpack.c.bf16 %v1077, %v1073
      %v1130 = vpack.c.bf16 %v1078, %v1074
      %v1131 = vpack.c.bf16 %v1083, %v1079
      %v1132 = vpack.c.bf16 %v1084, %v1080
      %v1133 = vpack.c.bf16 %v1085, %v1081
      %v1134 = vpack.c.bf16 %v1086, %v1082
      %v1135 = vpack.c.bf16 %v1091, %v1087
      %v1136 = vpack.c.bf16 %v1092, %v1088
      %v1137 = vpack.c.bf16 %v1093, %v1089
      %v1138 = vpack.c.bf16 %v1094, %v1090
      %v1139 = vpack.c.bf16 %v1099, %v1095
      %v1140 = vpack.c.bf16 %v1100, %v1096
      %v1141 = vpack.c.bf16 %v1101, %v1097
      %v1142 = vpack.c.bf16 %v1102, %v1098
      %v1143 = vpack.c.bf16 %v1107, %v1103
      %v1144 = vpack.c.bf16 %v1108, %v1104
      %v1145 = vpack.c.bf16 %v1109, %v1105
      %v1146 = vpack.c.bf16 %v1110, %v1106
      %v1147 = vpack.c.bf16 %v1115, %v1111
      %v1148 = vpack.c.bf16 %v1116, %v1112
      %v1149 = vpack.c.bf16 %v1117, %v1113
      %v1150 = vpack.c.bf16 %v1118, %v1114
      %v1151 = vld [vmem:[%s3] sm:$0xff]
      %v1152 = vld [vmem:[%s3 + $0x8] sm:$0xff]
      %v1153 = vld [vmem:[%s3 + $0x10] sm:$0xff]
      %v1154 = vld [vmem:[%s3 + $0x18] sm:$0xff]
      %v1155 = vld [vmem:[%s3 + $0x20] sm:$0xff]
      %v1156 = vld [vmem:[%s3 + $0x28] sm:$0xff]
      %v1157 = vld [vmem:[%s3 + $0x30] sm:$0xff]
      %v1158 = vld [vmem:[%s3 + $0x38] sm:$0xff]
      %v1159 = vld [vmem:[%s3 + $0x40] sm:$0xff]
      %v1160 = vld [vmem:[%s3 + $0x48] sm:$0xff]
      %v1161 = vld [vmem:[%s3 + $0x50] sm:$0xff]
      %v1162 = vld [vmem:[%s3 + $0x58] sm:$0xff]
      %v1163 = vld [vmem:[%s3 + $0x60] sm:$0xff]
      %v1164 = vld [vmem:[%s3 + $0x68] sm:$0xff]
      %v1165 = vld [vmem:[%s3 + $0x70] sm:$0xff]
      %v1166 = vld [vmem:[%s3 + $0x78] sm:$0xff]
      %v1167 = vld [vmem:[%s3 + $0x80] sm:$0xff]
      %v1168 = vld [vmem:[%s3 + $0x88] sm:$0xff]
      %v1169 = vld [vmem:[%s3 + $0x90] sm:$0xff]
      %v1170 = vld [vmem:[%s3 + $0x98] sm:$0xff]
      %v1171 = vld [vmem:[%s3 + $0xa0] sm:$0xff]
      %v1172 = vld [vmem:[%s3 + $0xa8] sm:$0xff]
      %v1173 = vld [vmem:[%s3 + $0xb0] sm:$0xff]
      %v1174 = vld [vmem:[%s3 + $0xb8] sm:$0xff]
      %v1175 = vld [vmem:[%s3 + $0xc0] sm:$0xff]
      %v1176 = vld [vmem:[%s3 + $0xc8] sm:$0xff]
      %v1177 = vld [vmem:[%s3 + $0xd0] sm:$0xff]
      %v1178 = vld [vmem:[%s3 + $0xd8] sm:$0xff]
      %v1179 = vld [vmem:[%s3 + $0xe0] sm:$0xff]
      %v1180 = vld [vmem:[%s3 + $0xe8] sm:$0xff]
      %v1181 = vld [vmem:[%s3 + $0xf0] sm:$0xff]
      %v1182 = vld [vmem:[%s3 + $0xf8] sm:$0xff]
      %v1183 = vld [vmem:[%s3 + $0x100] sm:$0xff]
      %v1184 = vld [vmem:[%s3 + $0x108] sm:$0xff]
      %v1185 = vld [vmem:[%s3 + $0x110] sm:$0xff]
      %v1186 = vld [vmem:[%s3 + $0x118] sm:$0xff]
      %v1187 = vld [vmem:[%s3 + $0x120] sm:$0xff]
      %v1188 = vld [vmem:[%s3 + $0x128] sm:$0xff]
      %v1189 = vld [vmem:[%s3 + $0x130] sm:$0xff]
      %v1190 = vld [vmem:[%s3 + $0x138] sm:$0xff]
      %v1191 = vld [vmem:[%s3 + $0x140] sm:$0xff]
      %v1192 = vld [vmem:[%s3 + $0x148] sm:$0xff]
      %v1193 = vld [vmem:[%s3 + $0x150] sm:$0xff]
      %v1194 = vld [vmem:[%s3 + $0x158] sm:$0xff]
      %v1195 = vld [vmem:[%s3 + $0x160] sm:$0xff]
      %v1196 = vld [vmem:[%s3 + $0x168] sm:$0xff]
      %v1197 = vld [vmem:[%s3 + $0x170] sm:$0xff]
      %v1198 = vld [vmem:[%s3 + $0x178] sm:$0xff]
      %v1199 = vld [vmem:[%s3 + $0x180] sm:$0xff]
      %v1200 = vld [vmem:[%s3 + $0x188] sm:$0xff]
      %v1201 = vld [vmem:[%s3 + $0x190] sm:$0xff]
      %v1202 = vld [vmem:[%s3 + $0x198] sm:$0xff]
      %v1203 = vld [vmem:[%s3 + $0x1a0] sm:$0xff]
      %v1204 = vld [vmem:[%s3 + $0x1a8] sm:$0xff]
      %v1205 = vld [vmem:[%s3 + $0x1b0] sm:$0xff]
      %v1206 = vld [vmem:[%s3 + $0x1b8] sm:$0xff]
      %v1207 = vld [vmem:[%s3 + $0x1c0] sm:$0xff]
      %v1208 = vld [vmem:[%s3 + $0x1c8] sm:$0xff]
      %v1209 = vld [vmem:[%s3 + $0x1d0] sm:$0xff]
      %v1210 = vld [vmem:[%s3 + $0x1d8] sm:$0xff]
      %v1211 = vld [vmem:[%s3 + $0x1e0] sm:$0xff]
      %v1212 = vld [vmem:[%s3 + $0x1e8] sm:$0xff]
      %v1213 = vld [vmem:[%s3 + $0x1f0] sm:$0xff]
      %v1214 = vld [vmem:[%s3 + $0x1f8] sm:$0xff]
      %v1215 = vld [vmem:[%s3 + $0x200] sm:$0xff]
      %v1216 = vld [vmem:[%s3 + $0x208] sm:$0xff]
      %v1217 = vld [vmem:[%s3 + $0x210] sm:$0xff]
      %v1218 = vld [vmem:[%s3 + $0x218] sm:$0xff]
      %v1219 = vld [vmem:[%s3 + $0x220] sm:$0xff]
      %v1220 = vld [vmem:[%s3 + $0x228] sm:$0xff]
      %v1221 = vld [vmem:[%s3 + $0x230] sm:$0xff]
      %v1222 = vld [vmem:[%s3 + $0x238] sm:$0xff]
      %v1223 = vld [vmem:[%s3 + $0x240] sm:$0xff]
      %v1224 = vld [vmem:[%s3 + $0x248] sm:$0xff]
      %v1225 = vld [vmem:[%s3 + $0x250] sm:$0xff]
      %v1226 = vld [vmem:[%s3 + $0x258] sm:$0xff]
      %v1227 = vld [vmem:[%s3 + $0x260] sm:$0xff]
      %v1228 = vld [vmem:[%s3 + $0x268] sm:$0xff]
      %v1229 = vld [vmem:[%s3 + $0x270] sm:$0xff]
      %v1230 = vld [vmem:[%s3 + $0x278] sm:$0xff]
      %v1231 = vld [vmem:[%s3 + $0x280] sm:$0xff]
      %v1232 = vld [vmem:[%s3 + $0x288] sm:$0xff]
      %v1233 = vld [vmem:[%s3 + $0x290] sm:$0xff]
      %v1234 = vld [vmem:[%s3 + $0x298] sm:$0xff]
      %v1235 = vld [vmem:[%s3 + $0x2a0] sm:$0xff]
      %v1236 = vld [vmem:[%s3 + $0x2a8] sm:$0xff]
      %v1237 = vld [vmem:[%s3 + $0x2b0] sm:$0xff]
      %v1238 = vld [vmem:[%s3 + $0x2b8] sm:$0xff]
      %v1239 = vld [vmem:[%s3 + $0x2c0] sm:$0xff]
      %v1240 = vld [vmem:[%s3 + $0x2c8] sm:$0xff]
      %v1241 = vld [vmem:[%s3 + $0x2d0] sm:$0xff]
      %v1242 = vld [vmem:[%s3 + $0x2d8] sm:$0xff]
      %v1243 = vld [vmem:[%s3 + $0x2e0] sm:$0xff]
      %v1244 = vld [vmem:[%s3 + $0x2e8] sm:$0xff]
      %v1245 = vld [vmem:[%s3 + $0x2f0] sm:$0xff]
      %v1246 = vld [vmem:[%s3 + $0x2f8] sm:$0xff]
      %v1247 = vld [vmem:[%s3 + $0x300] sm:$0xff]
      %v1248 = vld [vmem:[%s3 + $0x308] sm:$0xff]
      %v1249 = vld [vmem:[%s3 + $0x310] sm:$0xff]
      %v1250 = vld [vmem:[%s3 + $0x318] sm:$0xff]
      %v1251 = vld [vmem:[%s3 + $0x320] sm:$0xff]
      %v1252 = vld [vmem:[%s3 + $0x328] sm:$0xff]
      %v1253 = vld [vmem:[%s3 + $0x330] sm:$0xff]
      %v1254 = vld [vmem:[%s3 + $0x338] sm:$0xff]
      %v1255 = vld [vmem:[%s3 + $0x340] sm:$0xff]
      %v1256 = vld [vmem:[%s3 + $0x348] sm:$0xff]
      %v1257 = vld [vmem:[%s3 + $0x350] sm:$0xff]
      %v1258 = vld [vmem:[%s3 + $0x358] sm:$0xff]
      %v1259 = vld [vmem:[%s3 + $0x360] sm:$0xff]
      %v1260 = vld [vmem:[%s3 + $0x368] sm:$0xff]
      %v1261 = vld [vmem:[%s3 + $0x370] sm:$0xff]
      %v1262 = vld [vmem:[%s3 + $0x378] sm:$0xff]
      %v1263 = vld [vmem:[%s3 + $0x380] sm:$0xff]
      %v1264 = vld [vmem:[%s3 + $0x388] sm:$0xff]
      %v1265 = vld [vmem:[%s3 + $0x390] sm:$0xff]
      %v1266 = vld [vmem:[%s3 + $0x398] sm:$0xff]
      %v1267 = vld [vmem:[%s3 + $0x3a0] sm:$0xff]
      %v1268 = vld [vmem:[%s3 + $0x3a8] sm:$0xff]
      %v1269 = vld [vmem:[%s3 + $0x3b0] sm:$0xff]
      %v1270 = vld [vmem:[%s3 + $0x3b8] sm:$0xff]
      %v1271 = vld [vmem:[%s3 + $0x3c0] sm:$0xff]
      %v1272 = vld [vmem:[%s3 + $0x3c8] sm:$0xff]
      %v1273 = vld [vmem:[%s3 + $0x3d0] sm:$0xff]
      %v1274 = vld [vmem:[%s3 + $0x3d8] sm:$0xff]
      %v1275 = vld [vmem:[%s3 + $0x3e0] sm:$0xff]
      %v1276 = vld [vmem:[%s3 + $0x3e8] sm:$0xff]
      %v1277 = vld [vmem:[%s3 + $0x3f0] sm:$0xff]
      %v1278 = vld [vmem:[%s3 + $0x3f8] sm:$0xff]
      %v1279 = vld [vmem:[%s4] sm:$0xf]
      %v1281 = vlaneseq
      %v1282 = vshrl.u32 %v1281, 7
      %v1283 = vsub.s32 0, %v1282
      %v1284 = vrot.slane %v1279, %v1283
      %v1285 = vlaneseq
      %v1286 = vshrl.u32 %v1285, 7
      %v1287 = vsub.s32 1, %v1286
      %v1288 = vrot.slane %v1279, %v1287
      %v1289 = vlaneseq
      %v1290 = vshrl.u32 %v1289, 7
      %v1291 = vsub.s32 2, %v1290
      %v1292 = vrot.slane %v1279, %v1291
      %v1293 = vlaneseq
      %v1294 = vshrl.u32 %v1293, 7
      %v1295 = vsub.s32 3, %v1294
      %v1296 = vrot.slane %v1279, %v1295
      %v1429 = vunpack.c.l.b16 %v1151
      %v1430 = vunpack.c.h.b16 %v1151
      %v1431 = vunpack.c.l.b16 %v1152
      %v1432 = vunpack.c.h.b16 %v1152
      %v1433 = vunpack.c.l.b16 %v1153
      %v1434 = vunpack.c.h.b16 %v1153
      %v1435 = vunpack.c.l.b16 %v1154
      %v1436 = vunpack.c.h.b16 %v1154
      %v1437 = vunpack.c.l.b16 %v1155
      %v1438 = vunpack.c.h.b16 %v1155
      %v1439 = vunpack.c.l.b16 %v1156
      %v1440 = vunpack.c.h.b16 %v1156
      %v1441 = vunpack.c.l.b16 %v1157
      %v1442 = vunpack.c.h.b16 %v1157
      %v1443 = vunpack.c.l.b16 %v1158
      %v1444 = vunpack.c.h.b16 %v1158
      %v1445 = vunpack.c.l.b16 %v1159
      %v1446 = vunpack.c.h.b16 %v1159
      %v1447 = vunpack.c.l.b16 %v1160
      %v1448 = vunpack.c.h.b16 %v1160
      %v1449 = vunpack.c.l.b16 %v1161
      %v1450 = vunpack.c.h.b16 %v1161
      %v1451 = vunpack.c.l.b16 %v1162
      %v1452 = vunpack.c.h.b16 %v1162
      %v1453 = vunpack.c.l.b16 %v1163
      %v1454 = vunpack.c.h.b16 %v1163
      %v1455 = vunpack.c.l.b16 %v1164
      %v1456 = vunpack.c.h.b16 %v1164
      %v1457 = vunpack.c.l.b16 %v1165
      %v1458 = vunpack.c.h.b16 %v1165
      %v1459 = vunpack.c.l.b16 %v1166
      %v1460 = vunpack.c.h.b16 %v1166
      %v1461 = vunpack.c.l.b16 %v1167
      %v1462 = vunpack.c.h.b16 %v1167
      %v1463 = vunpack.c.l.b16 %v1168
      %v1464 = vunpack.c.h.b16 %v1168
      %v1465 = vunpack.c.l.b16 %v1169
      %v1466 = vunpack.c.h.b16 %v1169
      %v1467 = vunpack.c.l.b16 %v1170
      %v1468 = vunpack.c.h.b16 %v1170
      %v1469 = vunpack.c.l.b16 %v1171
      %v1470 = vunpack.c.h.b16 %v1171
      %v1471 = vunpack.c.l.b16 %v1172
      %v1472 = vunpack.c.h.b16 %v1172
      %v1473 = vunpack.c.l.b16 %v1173
      %v1474 = vunpack.c.h.b16 %v1173
      %v1475 = vunpack.c.l.b16 %v1174
      %v1476 = vunpack.c.h.b16 %v1174
      %v1477 = vunpack.c.l.b16 %v1175
      %v1478 = vunpack.c.h.b16 %v1175
      %v1479 = vunpack.c.l.b16 %v1176
      %v1480 = vunpack.c.h.b16 %v1176
      %v1481 = vunpack.c.l.b16 %v1177
      %v1482 = vunpack.c.h.b16 %v1177
      %v1483 = vunpack.c.l.b16 %v1178
      %v1484 = vunpack.c.h.b16 %v1178
      %v1485 = vunpack.c.l.b16 %v1179
      %v1486 = vunpack.c.h.b16 %v1179
      %v1487 = vunpack.c.l.b16 %v1180
      %v1488 = vunpack.c.h.b16 %v1180
      %v1489 = vunpack.c.l.b16 %v1181
      %v1490 = vunpack.c.h.b16 %v1181
      %v1491 = vunpack.c.l.b16 %v1182
      %v1492 = vunpack.c.h.b16 %v1182
      %v1493 = vunpack.c.l.b16 %v1183
      %v1494 = vunpack.c.h.b16 %v1183
      %v1495 = vunpack.c.l.b16 %v1184
      %v1496 = vunpack.c.h.b16 %v1184
      %v1497 = vunpack.c.l.b16 %v1185
      %v1498 = vunpack.c.h.b16 %v1185
      %v1499 = vunpack.c.l.b16 %v1186
      %v1500 = vunpack.c.h.b16 %v1186
      %v1501 = vunpack.c.l.b16 %v1187
      %v1502 = vunpack.c.h.b16 %v1187
      %v1503 = vunpack.c.l.b16 %v1188
      %v1504 = vunpack.c.h.b16 %v1188
      %v1505 = vunpack.c.l.b16 %v1189
      %v1506 = vunpack.c.h.b16 %v1189
      %v1507 = vunpack.c.l.b16 %v1190
      %v1508 = vunpack.c.h.b16 %v1190
      %v1509 = vunpack.c.l.b16 %v1191
      %v1510 = vunpack.c.h.b16 %v1191
      %v1511 = vunpack.c.l.b16 %v1192
      %v1512 = vunpack.c.h.b16 %v1192
      %v1513 = vunpack.c.l.b16 %v1193
      %v1514 = vunpack.c.h.b16 %v1193
      %v1515 = vunpack.c.l.b16 %v1194
      %v1516 = vunpack.c.h.b16 %v1194
      %v1517 = vunpack.c.l.b16 %v1195
      %v1518 = vunpack.c.h.b16 %v1195
      %v1519 = vunpack.c.l.b16 %v1196
      %v1520 = vunpack.c.h.b16 %v1196
      %v1521 = vunpack.c.l.b16 %v1197
      %v1522 = vunpack.c.h.b16 %v1197
      %v1523 = vunpack.c.l.b16 %v1198
      %v1524 = vunpack.c.h.b16 %v1198
      %v1525 = vunpack.c.l.b16 %v1199
      %v1526 = vunpack.c.h.b16 %v1199
      %v1527 = vunpack.c.l.b16 %v1200
      %v1528 = vunpack.c.h.b16 %v1200
      %v1529 = vunpack.c.l.b16 %v1201
      %v1530 = vunpack.c.h.b16 %v1201
      %v1531 = vunpack.c.l.b16 %v1202
      %v1532 = vunpack.c.h.b16 %v1202
      %v1533 = vunpack.c.l.b16 %v1203
      %v1534 = vunpack.c.h.b16 %v1203
      %v1535 = vunpack.c.l.b16 %v1204
      %v1536 = vunpack.c.h.b16 %v1204
      %v1537 = vunpack.c.l.b16 %v1205
      %v1538 = vunpack.c.h.b16 %v1205
      %v1539 = vunpack.c.l.b16 %v1206
      %v1540 = vunpack.c.h.b16 %v1206
      %v1541 = vunpack.c.l.b16 %v1207
      %v1542 = vunpack.c.h.b16 %v1207
      %v1543 = vunpack.c.l.b16 %v1208
      %v1544 = vunpack.c.h.b16 %v1208
      %v1545 = vunpack.c.l.b16 %v1209
      %v1546 = vunpack.c.h.b16 %v1209
      %v1547 = vunpack.c.l.b16 %v1210
      %v1548 = vunpack.c.h.b16 %v1210
      %v1549 = vunpack.c.l.b16 %v1211
      %v1550 = vunpack.c.h.b16 %v1211
      %v1551 = vunpack.c.l.b16 %v1212
      %v1552 = vunpack.c.h.b16 %v1212
      %v1553 = vunpack.c.l.b16 %v1213
      %v1554 = vunpack.c.h.b16 %v1213
      %v1555 = vunpack.c.l.b16 %v1214
      %v1556 = vunpack.c.h.b16 %v1214
      %v1557 = vunpack.c.l.b16 %v1215
      %v1558 = vunpack.c.h.b16 %v1215
      %v1559 = vunpack.c.l.b16 %v1216
      %v1560 = vunpack.c.h.b16 %v1216
      %v1561 = vunpack.c.l.b16 %v1217
      %v1562 = vunpack.c.h.b16 %v1217
      %v1563 = vunpack.c.l.b16 %v1218
      %v1564 = vunpack.c.h.b16 %v1218
      %v1565 = vunpack.c.l.b16 %v1219
      %v1566 = vunpack.c.h.b16 %v1219
      %v1567 = vunpack.c.l.b16 %v1220
      %v1568 = vunpack.c.h.b16 %v1220
      %v1569 = vunpack.c.l.b16 %v1221
      %v1570 = vunpack.c.h.b16 %v1221
      %v1571 = vunpack.c.l.b16 %v1222
      %v1572 = vunpack.c.h.b16 %v1222
      %v1573 = vunpack.c.l.b16 %v1223
      %v1574 = vunpack.c.h.b16 %v1223
      %v1575 = vunpack.c.l.b16 %v1224
      %v1576 = vunpack.c.h.b16 %v1224
      %v1577 = vunpack.c.l.b16 %v1225
      %v1578 = vunpack.c.h.b16 %v1225
      %v1579 = vunpack.c.l.b16 %v1226
      %v1580 = vunpack.c.h.b16 %v1226
      %v1581 = vunpack.c.l.b16 %v1227
      %v1582 = vunpack.c.h.b16 %v1227
      %v1583 = vunpack.c.l.b16 %v1228
      %v1584 = vunpack.c.h.b16 %v1228
      %v1585 = vunpack.c.l.b16 %v1229
      %v1586 = vunpack.c.h.b16 %v1229
      %v1587 = vunpack.c.l.b16 %v1230
      %v1588 = vunpack.c.h.b16 %v1230
      %v1589 = vunpack.c.l.b16 %v1231
      %v1590 = vunpack.c.h.b16 %v1231
      %v1591 = vunpack.c.l.b16 %v1232
      %v1592 = vunpack.c.h.b16 %v1232
      %v1593 = vunpack.c.l.b16 %v1233
      %v1594 = vunpack.c.h.b16 %v1233
      %v1595 = vunpack.c.l.b16 %v1234
      %v1596 = vunpack.c.h.b16 %v1234
      %v1597 = vunpack.c.l.b16 %v1235
      %v1598 = vunpack.c.h.b16 %v1235
      %v1599 = vunpack.c.l.b16 %v1236
      %v1600 = vunpack.c.h.b16 %v1236
      %v1601 = vunpack.c.l.b16 %v1237
      %v1602 = vunpack.c.h.b16 %v1237
      %v1603 = vunpack.c.l.b16 %v1238
      %v1604 = vunpack.c.h.b16 %v1238
      %v1605 = vunpack.c.l.b16 %v1239
      %v1606 = vunpack.c.h.b16 %v1239
      %v1607 = vunpack.c.l.b16 %v1240
      %v1608 = vunpack.c.h.b16 %v1240
      %v1609 = vunpack.c.l.b16 %v1241
      %v1610 = vunpack.c.h.b16 %v1241
      %v1611 = vunpack.c.l.b16 %v1242
      %v1612 = vunpack.c.h.b16 %v1242
      %v1613 = vunpack.c.l.b16 %v1243
      %v1614 = vunpack.c.h.b16 %v1243
      %v1615 = vunpack.c.l.b16 %v1244
      %v1616 = vunpack.c.h.b16 %v1244
      %v1617 = vunpack.c.l.b16 %v1245
      %v1618 = vunpack.c.h.b16 %v1245
      %v1619 = vunpack.c.l.b16 %v1246
      %v1620 = vunpack.c.h.b16 %v1246
      %v1621 = vunpack.c.l.b16 %v1247
      %v1622 = vunpack.c.h.b16 %v1247
      %v1623 = vunpack.c.l.b16 %v1248
      %v1624 = vunpack.c.h.b16 %v1248
      %v1625 = vunpack.c.l.b16 %v1249
      %v1626 = vunpack.c.h.b16 %v1249
      %v1627 = vunpack.c.l.b16 %v1250
      %v1628 = vunpack.c.h.b16 %v1250
      %v1629 = vunpack.c.l.b16 %v1251
      %v1630 = vunpack.c.h.b16 %v1251
      %v1631 = vunpack.c.l.b16 %v1252
      %v1632 = vunpack.c.h.b16 %v1252
      %v1633 = vunpack.c.l.b16 %v1253
      %v1634 = vunpack.c.h.b16 %v1253
      %v1635 = vunpack.c.l.b16 %v1254
      %v1636 = vunpack.c.h.b16 %v1254
      %v1637 = vunpack.c.l.b16 %v1255
      %v1638 = vunpack.c.h.b16 %v1255
      %v1639 = vunpack.c.l.b16 %v1256
      %v1640 = vunpack.c.h.b16 %v1256
      %v1641 = vunpack.c.l.b16 %v1257
      %v1642 = vunpack.c.h.b16 %v1257
      %v1643 = vunpack.c.l.b16 %v1258
      %v1644 = vunpack.c.h.b16 %v1258
      %v1645 = vunpack.c.l.b16 %v1259
      %v1646 = vunpack.c.h.b16 %v1259
      %v1647 = vunpack.c.l.b16 %v1260
      %v1648 = vunpack.c.h.b16 %v1260
      %v1649 = vunpack.c.l.b16 %v1261
      %v1650 = vunpack.c.h.b16 %v1261
      %v1651 = vunpack.c.l.b16 %v1262
      %v1652 = vunpack.c.h.b16 %v1262
      %v1653 = vunpack.c.l.b16 %v1263
      %v1654 = vunpack.c.h.b16 %v1263
      %v1655 = vunpack.c.l.b16 %v1264
      %v1656 = vunpack.c.h.b16 %v1264
      %v1657 = vunpack.c.l.b16 %v1265
      %v1658 = vunpack.c.h.b16 %v1265
      %v1659 = vunpack.c.l.b16 %v1266
      %v1660 = vunpack.c.h.b16 %v1266
      %v1661 = vunpack.c.l.b16 %v1267
      %v1662 = vunpack.c.h.b16 %v1267
      %v1663 = vunpack.c.l.b16 %v1268
      %v1664 = vunpack.c.h.b16 %v1268
      %v1665 = vunpack.c.l.b16 %v1269
      %v1666 = vunpack.c.h.b16 %v1269
      %v1667 = vunpack.c.l.b16 %v1270
      %v1668 = vunpack.c.h.b16 %v1270
      %v1669 = vunpack.c.l.b16 %v1271
      %v1670 = vunpack.c.h.b16 %v1271
      %v1671 = vunpack.c.l.b16 %v1272
      %v1672 = vunpack.c.h.b16 %v1272
      %v1673 = vunpack.c.l.b16 %v1273
      %v1674 = vunpack.c.h.b16 %v1273
      %v1675 = vunpack.c.l.b16 %v1274
      %v1676 = vunpack.c.h.b16 %v1274
      %v1677 = vunpack.c.l.b16 %v1275
      %v1678 = vunpack.c.h.b16 %v1275
      %v1679 = vunpack.c.l.b16 %v1276
      %v1680 = vunpack.c.h.b16 %v1276
      %v1681 = vunpack.c.l.b16 %v1277
      %v1682 = vunpack.c.h.b16 %v1277
      %v1683 = vunpack.c.l.b16 %v1278
      %v1684 = vunpack.c.h.b16 %v1278
      %v1685 = vpack.c.b16 %v1433, %v1429
      %v1686 = vpack.c.b16 %v1434, %v1430
      %v1687 = vpack.c.b16 %v1435, %v1431
      %v1688 = vpack.c.b16 %v1436, %v1432
      %v1689 = vpack.c.b16 %v1441, %v1437
      %v1690 = vpack.c.b16 %v1442, %v1438
      %v1691 = vpack.c.b16 %v1443, %v1439
      %v1692 = vpack.c.b16 %v1444, %v1440
      %v1693 = vpack.c.b16 %v1449, %v1445
      %v1694 = vpack.c.b16 %v1450, %v1446
      %v1695 = vpack.c.b16 %v1451, %v1447
      %v1696 = vpack.c.b16 %v1452, %v1448
      %v1697 = vpack.c.b16 %v1457, %v1453
      %v1698 = vpack.c.b16 %v1458, %v1454
      %v1699 = vpack.c.b16 %v1459, %v1455
      %v1700 = vpack.c.b16 %v1460, %v1456
      %v1701 = vpack.c.b16 %v1465, %v1461
      %v1702 = vpack.c.b16 %v1466, %v1462
      %v1703 = vpack.c.b16 %v1467, %v1463
      %v1704 = vpack.c.b16 %v1468, %v1464
      %v1705 = vpack.c.b16 %v1473, %v1469
      %v1706 = vpack.c.b16 %v1474, %v1470
      %v1707 = vpack.c.b16 %v1475, %v1471
      %v1708 = vpack.c.b16 %v1476, %v1472
      %v1709 = vpack.c.b16 %v1481, %v1477
      %v1710 = vpack.c.b16 %v1482, %v1478
      %v1711 = vpack.c.b16 %v1483, %v1479
      %v1712 = vpack.c.b16 %v1484, %v1480
      %v1713 = vpack.c.b16 %v1489, %v1485
      %v1714 = vpack.c.b16 %v1490, %v1486
      %v1715 = vpack.c.b16 %v1491, %v1487
      %v1716 = vpack.c.b16 %v1492, %v1488
      %v1717 = vpack.c.b16 %v1497, %v1493
      %v1718 = vpack.c.b16 %v1498, %v1494
      %v1719 = vpack.c.b16 %v1499, %v1495
      %v1720 = vpack.c.b16 %v1500, %v1496
      %v1721 = vpack.c.b16 %v1505, %v1501
      %v1722 = vpack.c.b16 %v1506, %v1502
      %v1723 = vpack.c.b16 %v1507, %v1503
      %v1724 = vpack.c.b16 %v1508, %v1504
      %v1725 = vpack.c.b16 %v1513, %v1509
      %v1726 = vpack.c.b16 %v1514, %v1510
      %v1727 = vpack.c.b16 %v1515, %v1511
      %v1728 = vpack.c.b16 %v1516, %v1512
      %v1729 = vpack.c.b16 %v1521, %v1517
      %v1730 = vpack.c.b16 %v1522, %v1518
      %v1731 = vpack.c.b16 %v1523, %v1519
      %v1732 = vpack.c.b16 %v1524, %v1520
      %v1733 = vpack.c.b16 %v1529, %v1525
      %v1734 = vpack.c.b16 %v1530, %v1526
      %v1735 = vpack.c.b16 %v1531, %v1527
      %v1736 = vpack.c.b16 %v1532, %v1528
      %v1737 = vpack.c.b16 %v1537, %v1533
      %v1738 = vpack.c.b16 %v1538, %v1534
      %v1739 = vpack.c.b16 %v1539, %v1535
      %v1740 = vpack.c.b16 %v1540, %v1536
      %v1741 = vpack.c.b16 %v1545, %v1541
      %v1742 = vpack.c.b16 %v1546, %v1542
      %v1743 = vpack.c.b16 %v1547, %v1543
      %v1744 = vpack.c.b16 %v1548, %v1544
      %v1745 = vpack.c.b16 %v1553, %v1549
      %v1746 = vpack.c.b16 %v1554, %v1550
      %v1747 = vpack.c.b16 %v1555, %v1551
      %v1748 = vpack.c.b16 %v1556, %v1552
      %v1749 = vpack.c.b16 %v1561, %v1557
      %v1750 = vpack.c.b16 %v1562, %v1558
      %v1751 = vpack.c.b16 %v1563, %v1559
      %v1752 = vpack.c.b16 %v1564, %v1560
      %v1753 = vpack.c.b16 %v1569, %v1565
      %v1754 = vpack.c.b16 %v1570, %v1566
      %v1755 = vpack.c.b16 %v1571, %v1567
      %v1756 = vpack.c.b16 %v1572, %v1568
      %v1757 = vpack.c.b16 %v1577, %v1573
      %v1758 = vpack.c.b16 %v1578, %v1574
      %v1759 = vpack.c.b16 %v1579, %v1575
      %v1760 = vpack.c.b16 %v1580, %v1576
      %v1761 = vpack.c.b16 %v1585, %v1581
      %v1762 = vpack.c.b16 %v1586, %v1582
      %v1763 = vpack.c.b16 %v1587, %v1583
      %v1764 = vpack.c.b16 %v1588, %v1584
      %v1765 = vpack.c.b16 %v1593, %v1589
      %v1766 = vpack.c.b16 %v1594, %v1590
      %v1767 = vpack.c.b16 %v1595, %v1591
      %v1768 = vpack.c.b16 %v1596, %v1592
      %v1769 = vpack.c.b16 %v1601, %v1597
      %v1770 = vpack.c.b16 %v1602, %v1598
      %v1771 = vpack.c.b16 %v1603, %v1599
      %v1772 = vpack.c.b16 %v1604, %v1600
      %v1773 = vpack.c.b16 %v1609, %v1605
      %v1774 = vpack.c.b16 %v1610, %v1606
      %v1775 = vpack.c.b16 %v1611, %v1607
      %v1776 = vpack.c.b16 %v1612, %v1608
      %v1777 = vpack.c.b16 %v1617, %v1613
      %v1778 = vpack.c.b16 %v1618, %v1614
      %v1779 = vpack.c.b16 %v1619, %v1615
      %v1780 = vpack.c.b16 %v1620, %v1616
      %v1781 = vpack.c.b16 %v1625, %v1621
      %v1782 = vpack.c.b16 %v1626, %v1622
      %v1783 = vpack.c.b16 %v1627, %v1623
      %v1784 = vpack.c.b16 %v1628, %v1624
      %v1785 = vpack.c.b16 %v1633, %v1629
      %v1786 = vpack.c.b16 %v1634, %v1630
      %v1787 = vpack.c.b16 %v1635, %v1631
      %v1788 = vpack.c.b16 %v1636, %v1632
      %v1789 = vpack.c.b16 %v1641, %v1637
      %v1790 = vpack.c.b16 %v1642, %v1638
      %v1791 = vpack.c.b16 %v1643, %v1639
      %v1792 = vpack.c.b16 %v1644, %v1640
      %v1793 = vpack.c.b16 %v1649, %v1645
      %v1794 = vpack.c.b16 %v1650, %v1646
      %v1795 = vpack.c.b16 %v1651, %v1647
      %v1796 = vpack.c.b16 %v1652, %v1648
      %v1797 = vpack.c.b16 %v1657, %v1653
      %v1798 = vpack.c.b16 %v1658, %v1654
      %v1799 = vpack.c.b16 %v1659, %v1655
      %v1800 = vpack.c.b16 %v1660, %v1656
      %v1801 = vpack.c.b16 %v1665, %v1661
      %v1802 = vpack.c.b16 %v1666, %v1662
      %v1803 = vpack.c.b16 %v1667, %v1663
      %v1804 = vpack.c.b16 %v1668, %v1664
      %v1805 = vpack.c.b16 %v1673, %v1669
      %v1806 = vpack.c.b16 %v1674, %v1670
      %v1807 = vpack.c.b16 %v1675, %v1671
      %v1808 = vpack.c.b16 %v1676, %v1672
      %v1809 = vpack.c.b16 %v1681, %v1677
      %v1810 = vpack.c.b16 %v1682, %v1678
      %v1811 = vpack.c.b16 %v1683, %v1679
      %v1812 = vpack.c.b16 %v1684, %v1680
      %1941 = vmatprep.subr.bf16.mxu0 %v1686
      %1942 = vmatpush1.bf16.msra.mxu0 %v1685
      %1943 = vmatprep.subr.bf16.mxu0 %v1690
      %1944 = vmatpush1.bf16.msra.mxu0 %v1689
      %1945 = vmatprep.subr.bf16.mxu0 %v1694
      %1946 = vmatpush1.bf16.msra.mxu0 %v1693
      %1947 = vmatprep.subr.bf16.mxu0 %v1698
      %1948 = vmatpush1.bf16.msra.mxu0 %v1697
      %1949 = vmatprep.subr.bf16.mxu0 %v1702
      %1950 = vmatpush1.bf16.msra.mxu0 %v1701
      %1951 = vmatprep.subr.bf16.mxu0 %v1706
      %1952 = vmatpush1.bf16.msra.mxu0 %v1705
      %1953 = vmatprep.subr.bf16.mxu0 %v1710
      %1954 = vmatpush1.bf16.msra.mxu0 %v1709
      %1955 = vmatprep.subr.bf16.mxu0 %v1714
      %1956 = vmatpush1.bf16.msra.mxu0 %v1713
      %1957 = vmatprep.subr.bf16.mxu0 %v1718
      %1958 = vmatpush1.bf16.msra.mxu0 %v1717
      %1959 = vmatprep.subr.bf16.mxu0 %v1722
      %1960 = vmatpush1.bf16.msra.mxu0 %v1721
      %1961 = vmatprep.subr.bf16.mxu0 %v1726
      %1962 = vmatpush1.bf16.msra.mxu0 %v1725
      %1963 = vmatprep.subr.bf16.mxu0 %v1730
      %1964 = vmatpush1.bf16.msra.mxu0 %v1729
      %1965 = vmatprep.subr.bf16.mxu0 %v1734
      %1966 = vmatpush1.bf16.msra.mxu0 %v1733
      %1967 = vmatprep.subr.bf16.mxu0 %v1738
      %1968 = vmatpush1.bf16.msra.mxu0 %v1737
      %1969 = vmatprep.subr.bf16.mxu0 %v1742
      %1970 = vmatpush1.bf16.msra.mxu0 %v1741
      %1971 = vmatprep.subr.bf16.mxu0 %v1746
      %1972 = vmatpush1.bf16.msra.mxu0 %v1745
      %1973 = vmatprep.mubr.bf16.mxu0 %v1120
      %1974 = vmatmul.mubr.bf16.gmra.mrb[0].mxu0 %v1119
      %v1975 = vpop.f32.mrb[0].mxu0
      %v1976 = vadd.f32 %v1284, %v1975
      %v1977 = vpop.f32.mrb[0].mxu0
      %v1978 = vadd.f32 %v1288, %v1977
      %v1979 = vpop.f32.mrb[0].mxu0
      %v1980 = vadd.f32 %v1284, %v1979
      %v1981 = vpop.f32.mrb[0].mxu0
      %v1982 = vadd.f32 %v1288, %v1981
      %1983 = vmatprep.mubr.bf16.mxu0 %v1124
      %1984 = vmatmul.mubr.bf16.gmra.mrb[0].mxu0 %v1123
      %v1985 = vpop.f32.mrb[0].mxu0
      %v1986 = vadd.f32 %v1284, %v1985
      %v1987 = vpop.f32.mrb[0].mxu0
      %v1988 = vadd.f32 %v1288, %v1987
      %v1989 = vpop.f32.mrb[0].mxu0
      %v1990 = vadd.f32 %v1284, %v1989
      %v1991 = vpop.f32.mrb[0].mxu0
      %v1992 = vadd.f32 %v1288, %v1991
      %1993 = vmatprep.mubr.bf16.mxu0 %v1128
      %1994 = vmatmul.mubr.bf16.gmra.mrb[0].mxu0 %v1127
      %v1995 = vpop.f32.mrb[0].mxu0
      %v1996 = vadd.f32 %v1284, %v1995
      %v1997 = vpop.f32.mrb[0].mxu0
      %v1998 = vadd.f32 %v1288, %v1997
      %v1999 = vpop.f32.mrb[0].mxu0
      %v2000 = vadd.f32 %v1284, %v1999
      %v2001 = vpop.f32.mrb[0].mxu0
      %v2002 = vadd.f32 %v1288, %v2001
      %2003 = vmatprep.mubr.bf16.mxu0 %v1132
      %2004 = vmatmul.mubr.bf16.gmra.mrb[0].mxu0 %v1131
      %v2005 = vpop.f32.mrb[0].mxu0
      %v2006 = vadd.f32 %v1284, %v2005
      %v2007 = vpop.f32.mrb[0].mxu0
      %v2008 = vadd.f32 %v1288, %v2007
      %v2009 = vpop.f32.mrb[0].mxu0
      %v2010 = vadd.f32 %v1284, %v2009
      %v2011 = vpop.f32.mrb[0].mxu0
      %v2012 = vadd.f32 %v1288, %v2011
      %2013 = vmatprep.mubr.bf16.mxu0 %v1136
      %2014 = vmatmul.mubr.bf16.gmra.mrb[0].mxu0 %v1135
      %v2015 = vpop.f32.mrb[0].mxu0
      %v2016 = vadd.f32 %v1284, %v2015
      %v2017 = vpop.f32.mrb[0].mxu0
      %v2018 = vadd.f32 %v1288, %v2017
      %v2019 = vpop.f32.mrb[0].mxu0
      %v2020 = vadd.f32 %v1284, %v2019
      %v2021 = vpop.f32.mrb[0].mxu0
      %v2022 = vadd.f32 %v1288, %v2021
      %2023 = vmatprep.mubr.bf16.mxu0 %v1140
      %2024 = vmatmul.mubr.bf16.gmra.mrb[0].mxu0 %v1139
      %v2025 = vpop.f32.mrb[0].mxu0
      %v2026 = vadd.f32 %v1284, %v2025
      %v2027 = vpop.f32.mrb[0].mxu0
      %v2028 = vadd.f32 %v1288, %v2027
      %v2029 = vpop.f32.mrb[0].mxu0
      %v2030 = vadd.f32 %v1284, %v2029
      %v2031 = vpop.f32.mrb[0].mxu0
      %v2032 = vadd.f32 %v1288, %v2031
      %2033 = vmatprep.mubr.bf16.mxu0 %v1144
      %2034 = vmatmul.mubr.bf16.gmra.mrb[0].mxu0 %v1143
      %v2035 = vpop.f32.mrb[0].mxu0
      %v2036 = vadd.f32 %v1284, %v2035
      %v2037 = vpop.f32.mrb[0].mxu0
      %v2038 = vadd.f32 %v1288, %v2037
      %v2039 = vpop.f32.mrb[0].mxu0
      %v2040 = vadd.f32 %v1284, %v2039
      %v2041 = vpop.f32.mrb[0].mxu0
      %v2042 = vadd.f32 %v1288, %v2041
      %2043 = vmatprep.mubr.bf16.mxu0 %v1148
      %2044 = vmatmul.mubr.bf16.gmra.mrb[0].mxu0 %v1147
      %v2045 = vpop.f32.mrb[0].mxu0
      %v2046 = vadd.f32 %v1284, %v2045
      %v2047 = vpop.f32.mrb[0].mxu0
      %v2048 = vadd.f32 %v1288, %v2047
      %v2049 = vpop.f32.mrb[0].mxu0
      %v2050 = vadd.f32 %v1284, %v2049
      %v2051 = vpop.f32.mrb[0].mxu0
      %v2052 = vadd.f32 %v1288, %v2051
      %2053 = vdwg.mxu0
      %2054 = vmatprep.subr.bf16.mxu0 %v1750
      %2055 = vmatpush1.bf16.msra.mxu0 %v1749
      %2056 = vmatprep.subr.bf16.mxu0 %v1754
      %2057 = vmatpush1.bf16.msra.mxu0 %v1753
      %2058 = vmatprep.subr.bf16.mxu0 %v1758
      %2059 = vmatpush1.bf16.msra.mxu0 %v1757
      %2060 = vmatprep.subr.bf16.mxu0 %v1762
      %2061 = vmatpush1.bf16.msra.mxu0 %v1761
      %2062 = vmatprep.subr.bf16.mxu0 %v1766
      %2063 = vmatpush1.bf16.msra.mxu0 %v1765
      %2064 = vmatprep.subr.bf16.mxu0 %v1770
      %2065 = vmatpush1.bf16.msra.mxu0 %v1769
      %2066 = vmatprep.subr.bf16.mxu0 %v1774
      %2067 = vmatpush1.bf16.msra.mxu0 %v1773
      %2068 = vmatprep.subr.bf16.mxu0 %v1778
      %2069 = vmatpush1.bf16.msra.mxu0 %v1777
      %2070 = vmatprep.subr.bf16.mxu0 %v1782
      %2071 = vmatpush1.bf16.msra.mxu0 %v1781
      %2072 = vmatprep.subr.bf16.mxu0 %v1786
      %2073 = vmatpush1.bf16.msra.mxu0 %v1785
      %2074 = vmatprep.subr.bf16.mxu0 %v1790
      %2075 = vmatpush1.bf16.msra.mxu0 %v1789
      %2076 = vmatprep.subr.bf16.mxu0 %v1794
      %2077 = vmatpush1.bf16.msra.mxu0 %v1793
      %2078 = vmatprep.subr.bf16.mxu0 %v1798
      %2079 = vmatpush1.bf16.msra.mxu0 %v1797
      %2080 = vmatprep.subr.bf16.mxu0 %v1802
      %2081 = vmatpush1.bf16.msra.mxu0 %v1801
      %2082 = vmatprep.subr.bf16.mxu0 %v1806
      %2083 = vmatpush1.bf16.msra.mxu0 %v1805
      %2084 = vmatprep.subr.bf16.mxu0 %v1810
      %2085 = vmatpush1.bf16.msra.mxu0 %v1809
      %2086 = vmatprep.mubr.bf16.mxu0 %v1122
      %2087 = vmatmul.mubr.bf16.gmra.mrb[0].mxu0 %v1121
      %v2088 = vpop.f32.mrb[0].mxu0
      %v2089 = vadd.f32 %v1976, %v2088
      %v2090 = vpop.f32.mrb[0].mxu0
      %v2091 = vadd.f32 %v1978, %v2090
      %v2092 = vpop.f32.mrb[0].mxu0
      %v2093 = vadd.f32 %v1980, %v2092
      %v2094 = vpop.f32.mrb[0].mxu0
      %v2095 = vadd.f32 %v1982, %v2094
      %2096 = vmatprep.mubr.bf16.mxu0 %v1126
      %2097 = vmatmul.mubr.bf16.gmra.mrb[0].mxu0 %v1125
      %v2098 = vpop.f32.mrb[0].mxu0
      %v2099 = vadd.f32 %v1986, %v2098
      %v2100 = vpop.f32.mrb[0].mxu0
      %v2101 = vadd.f32 %v1988, %v2100
      %v2102 = vpop.f32.mrb[0].mxu0
      %v2103 = vadd.f32 %v1990, %v2102
      %v2104 = vpop.f32.mrb[0].mxu0
      %v2105 = vadd.f32 %v1992, %v2104
      %2106 = vmatprep.mubr.bf16.mxu0 %v1130
      %2107 = vmatmul.mubr.bf16.gmra.mrb[0].mxu0 %v1129
      %v2108 = vpop.f32.mrb[0].mxu0
      %v2109 = vadd.f32 %v1996, %v2108
      %v2110 = vpop.f32.mrb[0].mxu0
      %v2111 = vadd.f32 %v1998, %v2110
      %v2112 = vpop.f32.mrb[0].mxu0
      %v2113 = vadd.f32 %v2000, %v2112
      %v2114 = vpop.f32.mrb[0].mxu0
      %v2115 = vadd.f32 %v2002, %v2114
      %2116 = vmatprep.mubr.bf16.mxu0 %v1134
      %2117 = vmatmul.mubr.bf16.gmra.mrb[0].mxu0 %v1133
      %v2118 = vpop.f32.mrb[0].mxu0
      %v2119 = vadd.f32 %v2006, %v2118
      %v2120 = vpop.f32.mrb[0].mxu0
      %v2121 = vadd.f32 %v2008, %v2120
      %v2122 = vpop.f32.mrb[0].mxu0
      %v2123 = vadd.f32 %v2010, %v2122
      %v2124 = vpop.f32.mrb[0].mxu0
      %v2125 = vadd.f32 %v2012, %v2124
      %2126 = vmatprep.mubr.bf16.mxu0 %v1138
      %2127 = vmatmul.mubr.bf16.gmra.mrb[0].mxu0 %v1137
      %v2128 = vpop.f32.mrb[0].mxu0
      %v2129 = vadd.f32 %v2016, %v2128
      %v2130 = vpop.f32.mrb[0].mxu0
      %v2131 = vadd.f32 %v2018, %v2130
      %v2132 = vpop.f32.mrb[0].mxu0
      %v2133 = vadd.f32 %v2020, %v2132
      %v2134 = vpop.f32.mrb[0].mxu0
      %v2135 = vadd.f32 %v2022, %v2134
      %2136 = vmatprep.mubr.bf16.mxu0 %v1142
      %2137 = vmatmul.mubr.bf16.gmra.mrb[0].mxu0 %v1141
      %v2138 = vpop.f32.mrb[0].mxu0
      %v2139 = vadd.f32 %v2026, %v2138
      %v2140 = vpop.f32.mrb[0].mxu0
      %v2141 = vadd.f32 %v2028, %v2140
      %v2142 = vpop.f32.mrb[0].mxu0
      %v2143 = vadd.f32 %v2030, %v2142
      %v2144 = vpop.f32.mrb[0].mxu0
      %v2145 = vadd.f32 %v2032, %v2144
      %2146 = vmatprep.mubr.bf16.mxu0 %v1146
      %2147 = vmatmul.mubr.bf16.gmra.mrb[0].mxu0 %v1145
      %v2148 = vpop.f32.mrb[0].mxu0
      %v2149 = vadd.f32 %v2036, %v2148
      %v2150 = vpop.f32.mrb[0].mxu0
      %v2151 = vadd.f32 %v2038, %v2150
      %v2152 = vpop.f32.mrb[0].mxu0
      %v2153 = vadd.f32 %v2040, %v2152
      %v2154 = vpop.f32.mrb[0].mxu0
      %v2155 = vadd.f32 %v2042, %v2154
      %2156 = vmatprep.mubr.bf16.mxu0 %v1150
      %2157 = vmatmul.mubr.bf16.gmra.mrb[0].mxu0 %v1149
      %v2158 = vpop.f32.mrb[0].mxu0
      %v2159 = vadd.f32 %v2046, %v2158
      %v2160 = vpop.f32.mrb[0].mxu0
      %v2161 = vadd.f32 %v2048, %v2160
      %v2162 = vpop.f32.mrb[0].mxu0
      %v2163 = vadd.f32 %v2050, %v2162
      %v2164 = vpop.f32.mrb[0].mxu0
      %v2165 = vadd.f32 %v2052, %v2164
      %2166 = vdwg.mxu0
      %2167 = vmatprep.subr.bf16.mxu0 %v1688
      %2168 = vmatpush1.bf16.msra.mxu0 %v1687
      %2169 = vmatprep.subr.bf16.mxu0 %v1692
      %2170 = vmatpush1.bf16.msra.mxu0 %v1691
      %2171 = vmatprep.subr.bf16.mxu0 %v1696
      %2172 = vmatpush1.bf16.msra.mxu0 %v1695
      %2173 = vmatprep.subr.bf16.mxu0 %v1700
      %2174 = vmatpush1.bf16.msra.mxu0 %v1699
      %2175 = vmatprep.subr.bf16.mxu0 %v1704
      %2176 = vmatpush1.bf16.msra.mxu0 %v1703
      %2177 = vmatprep.subr.bf16.mxu0 %v1708
      %2178 = vmatpush1.bf16.msra.mxu0 %v1707
      %2179 = vmatprep.subr.bf16.mxu0 %v1712
      %2180 = vmatpush1.bf16.msra.mxu0 %v1711
      %2181 = vmatprep.subr.bf16.mxu0 %v1716
      %2182 = vmatpush1.bf16.msra.mxu0 %v1715
      %2183 = vmatprep.subr.bf16.mxu0 %v1720
      %2184 = vmatpush1.bf16.msra.mxu0 %v1719
      %2185 = vmatprep.subr.bf16.mxu0 %v1724
      %2186 = vmatpush1.bf16.msra.mxu0 %v1723
      %2187 = vmatprep.subr.bf16.mxu0 %v1728
      %2188 = vmatpush1.bf16.msra.mxu0 %v1727
      %2189 = vmatprep.subr.bf16.mxu0 %v1732
      %2190 = vmatpush1.bf16.msra.mxu0 %v1731
      %2191 = vmatprep.subr.bf16.mxu0 %v1736
      %2192 = vmatpush1.bf16.msra.mxu0 %v1735
      %2193 = vmatprep.subr.bf16.mxu0 %v1740
      %2194 = vmatpush1.bf16.msra.mxu0 %v1739
      %2195 = vmatprep.subr.bf16.mxu0 %v1744
      %2196 = vmatpush1.bf16.msra.mxu0 %v1743
      %2197 = vmatprep.subr.bf16.mxu0 %v1748
      %2198 = vmatpush1.bf16.msra.mxu0 %v1747
      %2199 = vmatprep.mubr.bf16.mxu0 %v1120
      %2200 = vmatmul.mubr.bf16.gmra.mrb[0].mxu0 %v1119
      %v2201 = vpop.f32.mrb[0].mxu0
      %v2202 = vadd.f32 %v1292, %v2201
      %v2203 = vpop.f32.mrb[0].mxu0
      %v2204 = vadd.f32 %v1296, %v2203
      %v2205 = vpop.f32.mrb[0].mxu0
      %v2206 = vadd.f32 %v1292, %v2205
      %v2207 = vpop.f32.mrb[0].mxu0
      %v2208 = vadd.f32 %v1296, %v2207
      %2209 = vmatprep.mubr.bf16.mxu0 %v1124
      %2210 = vmatmul.mubr.bf16.gmra.mrb[0].mxu0 %v1123
      %v2211 = vpop.f32.mrb[0].mxu0
      %v2212 = vadd.f32 %v1292, %v2211
      %v2213 = vpop.f32.mrb[0].mxu0
      %v2214 = vadd.f32 %v1296, %v2213
      %v2215 = vpop.f32.mrb[0].mxu0
      %v2216 = vadd.f32 %v1292, %v2215
      %v2217 = vpop.f32.mrb[0].mxu0
      %v2218 = vadd.f32 %v1296, %v2217
      %2219 = vmatprep.mubr.bf16.mxu0 %v1128
      %2220 = vmatmul.mubr.bf16.gmra.mrb[0].mxu0 %v1127
      %v2221 = vpop.f32.mrb[0].mxu0
      %v2222 = vadd.f32 %v1292, %v2221
      %v2223 = vpop.f32.mrb[0].mxu0
      %v2224 = vadd.f32 %v1296, %v2223
      %v2225 = vpop.f32.mrb[0].mxu0
      %v2226 = vadd.f32 %v1292, %v2225
      %v2227 = vpop.f32.mrb[0].mxu0
      %v2228 = vadd.f32 %v1296, %v2227
      %2229 = vmatprep.mubr.bf16.mxu0 %v1132
      %2230 = vmatmul.mubr.bf16.gmra.mrb[0].mxu0 %v1131
      %v2231 = vpop.f32.mrb[0].mxu0
      %v2232 = vadd.f32 %v1292, %v2231
      %v2233 = vpop.f32.mrb[0].mxu0
      %v2234 = vadd.f32 %v1296, %v2233
      %v2235 = vpop.f32.mrb[0].mxu0
      %v2236 = vadd.f32 %v1292, %v2235
      %v2237 = vpop.f32.mrb[0].mxu0
      %v2238 = vadd.f32 %v1296, %v2237
      %2239 = vmatprep.mubr.bf16.mxu0 %v1136
      %2240 = vmatmul.mubr.bf16.gmra.mrb[0].mxu0 %v1135
      %v2241 = vpop.f32.mrb[0].mxu0
      %v2242 = vadd.f32 %v1292, %v2241
      %v2243 = vpop.f32.mrb[0].mxu0
      %v2244 = vadd.f32 %v1296, %v2243
      %v2245 = vpop.f32.mrb[0].mxu0
      %v2246 = vadd.f32 %v1292, %v2245
      %v2247 = vpop.f32.mrb[0].mxu0
      %v2248 = vadd.f32 %v1296, %v2247
      %2249 = vmatprep.mubr.bf16.mxu0 %v1140
      %2250 = vmatmul.mubr.bf16.gmra.mrb[0].mxu0 %v1139
      %v2251 = vpop.f32.mrb[0].mxu0
      %v2252 = vadd.f32 %v1292, %v2251
      %v2253 = vpop.f32.mrb[0].mxu0
      %v2254 = vadd.f32 %v1296, %v2253
      %v2255 = vpop.f32.mrb[0].mxu0
      %v2256 = vadd.f32 %v1292, %v2255
      %v2257 = vpop.f32.mrb[0].mxu0
      %v2258 = vadd.f32 %v1296, %v2257
      %2259 = vmatprep.mubr.bf16.mxu0 %v1144
      %2260 = vmatmul.mubr.bf16.gmra.mrb[0].mxu0 %v1143
      %v2261 = vpop.f32.mrb[0].mxu0
      %v2262 = vadd.f32 %v1292, %v2261
      %v2263 = vpop.f32.mrb[0].mxu0
      %v2264 = vadd.f32 %v1296, %v2263
      %v2265 = vpop.f32.mrb[0].mxu0
      %v2266 = vadd.f32 %v1292, %v2265
      %v2267 = vpop.f32.mrb[0].mxu0
      %v2268 = vadd.f32 %v1296, %v2267
      %2269 = vmatprep.mubr.bf16.mxu0 %v1148
      %2270 = vmatmul.mubr.bf16.gmra.mrb[0].mxu0 %v1147
      %v2271 = vpop.f32.mrb[0].mxu0
      %v2272 = vadd.f32 %v1292, %v2271
      %v2273 = vpop.f32.mrb[0].mxu0
      %v2274 = vadd.f32 %v1296, %v2273
      %v2275 = vpop.f32.mrb[0].mxu0
      %v2276 = vadd.f32 %v1292, %v2275
      %v2277 = vpop.f32.mrb[0].mxu0
      %v2278 = vadd.f32 %v1296, %v2277
      %2279 = vdwg.mxu0
      %2280 = vmatprep.subr.bf16.mxu0 %v1752
      %2281 = vmatpush1.bf16.msra.mxu0 %v1751
      %2282 = vmatprep.subr.bf16.mxu0 %v1756
      %2283 = vmatpush1.bf16.msra.mxu0 %v1755
      %2284 = vmatprep.subr.bf16.mxu0 %v1760
      %2285 = vmatpush1.bf16.msra.mxu0 %v1759
      %2286 = vmatprep.subr.bf16.mxu0 %v1764
      %2287 = vmatpush1.bf16.msra.mxu0 %v1763
      %2288 = vmatprep.subr.bf16.mxu0 %v1768
      %2289 = vmatpush1.bf16.msra.mxu0 %v1767
      %2290 = vmatprep.subr.bf16.mxu0 %v1772
      %2291 = vmatpush1.bf16.msra.mxu0 %v1771
      %2292 = vmatprep.subr.bf16.mxu0 %v1776
      %2293 = vmatpush1.bf16.msra.mxu0 %v1775
      %2294 = vmatprep.subr.bf16.mxu0 %v1780
      %2295 = vmatpush1.bf16.msra.mxu0 %v1779
      %2296 = vmatprep.subr.bf16.mxu0 %v1784
      %2297 = vmatpush1.bf16.msra.mxu0 %v1783
      %2298 = vmatprep.subr.bf16.mxu0 %v1788
      %2299 = vmatpush1.bf16.msra.mxu0 %v1787
      %2300 = vmatprep.subr.bf16.mxu0 %v1792
      %2301 = vmatpush1.bf16.msra.mxu0 %v1791
      %2302 = vmatprep.subr.bf16.mxu0 %v1796
      %2303 = vmatpush1.bf16.msra.mxu0 %v1795
      %2304 = vmatprep.subr.bf16.mxu0 %v1800
      %2305 = vmatpush1.bf16.msra.mxu0 %v1799
      %2306 = vmatprep.subr.bf16.mxu0 %v1804
      %2307 = vmatpush1.bf16.msra.mxu0 %v1803
      %2308 = vmatprep.subr.bf16.mxu0 %v1808
      %2309 = vmatpush1.bf16.msra.mxu0 %v1807
      %2310 = vmatprep.subr.bf16.mxu0 %v1812
      %2311 = vmatpush1.bf16.msra.mxu0 %v1811
      %2312 = vmatprep.mubr.bf16.mxu0 %v1122
      %2313 = vmatmul.mubr.bf16.gmra.mrb[0].mxu0 %v1121
      %v2314 = vpop.f32.mrb[0].mxu0
      %v2315 = vadd.f32 %v2202, %v2314
      %v2316 = vpop.f32.mrb[0].mxu0
      %v2317 = vadd.f32 %v2204, %v2316
      %v2318 = vpop.f32.mrb[0].mxu0
      %v2319 = vadd.f32 %v2206, %v2318
      %v2320 = vpop.f32.mrb[0].mxu0
      %v2321 = vadd.f32 %v2208, %v2320
      %2322 = vmatprep.mubr.bf16.mxu0 %v1126
      %2323 = vmatmul.mubr.bf16.gmra.mrb[0].mxu0 %v1125
      %v2324 = vpop.f32.mrb[0].mxu0
      %v2325 = vadd.f32 %v2212, %v2324
      %v2326 = vpop.f32.mrb[0].mxu0
      %v2327 = vadd.f32 %v2214, %v2326
      %v2328 = vpop.f32.mrb[0].mxu0
      %v2329 = vadd.f32 %v2216, %v2328
      %v2330 = vpop.f32.mrb[0].mxu0
      %v2331 = vadd.f32 %v2218, %v2330
      %2332 = vmatprep.mubr.bf16.mxu0 %v1130
      %2333 = vmatmul.mubr.bf16.gmra.mrb[0].mxu0 %v1129
      %v2334 = vpop.f32.mrb[0].mxu0
      %v2335 = vadd.f32 %v2222, %v2334
      %v2336 = vpop.f32.mrb[0].mxu0
      %v2337 = vadd.f32 %v2224, %v2336
      %v2338 = vpop.f32.mrb[0].mxu0
      %v2339 = vadd.f32 %v2226, %v2338
      %v2340 = vpop.f32.mrb[0].mxu0
      %v2341 = vadd.f32 %v2228, %v2340
      %2342 = vmatprep.mubr.bf16.mxu0 %v1134
      %2343 = vmatmul.mubr.bf16.gmra.mrb[0].mxu0 %v1133
      %v2344 = vpop.f32.mrb[0].mxu0
      %v2345 = vadd.f32 %v2232, %v2344
      %v2346 = vpop.f32.mrb[0].mxu0
      %v2347 = vadd.f32 %v2234, %v2346
      %v2348 = vpop.f32.mrb[0].mxu0
      %v2349 = vadd.f32 %v2236, %v2348
      %v2350 = vpop.f32.mrb[0].mxu0
      %v2351 = vadd.f32 %v2238, %v2350
      %2352 = vmatprep.mubr.bf16.mxu0 %v1138
      %2353 = vmatmul.mubr.bf16.gmra.mrb[0].mxu0 %v1137
      %v2354 = vpop.f32.mrb[0].mxu0
      %v2355 = vadd.f32 %v2242, %v2354
      %v2356 = vpop.f32.mrb[0].mxu0
      %v2357 = vadd.f32 %v2244, %v2356
      %v2358 = vpop.f32.mrb[0].mxu0
      %v2359 = vadd.f32 %v2246, %v2358
      %v2360 = vpop.f32.mrb[0].mxu0
      %v2361 = vadd.f32 %v2248, %v2360
      %2362 = vmatprep.mubr.bf16.mxu0 %v1142
      %2363 = vmatmul.mubr.bf16.gmra.mrb[0].mxu0 %v1141
      %v2364 = vpop.f32.mrb[0].mxu0
      %v2365 = vadd.f32 %v2252, %v2364
      %v2366 = vpop.f32.mrb[0].mxu0
      %v2367 = vadd.f32 %v2254, %v2366
      %v2368 = vpop.f32.mrb[0].mxu0
      %v2369 = vadd.f32 %v2256, %v2368
      %v2370 = vpop.f32.mrb[0].mxu0
      %v2371 = vadd.f32 %v2258, %v2370
      %2372 = vmatprep.mubr.bf16.mxu0 %v1146
      %2373 = vmatmul.mubr.bf16.gmra.mrb[0].mxu0 %v1145
      %v2374 = vpop.f32.mrb[0].mxu0
      %v2375 = vadd.f32 %v2262, %v2374
      %v2376 = vpop.f32.mrb[0].mxu0
      %v2377 = vadd.f32 %v2264, %v2376
      %v2378 = vpop.f32.mrb[0].mxu0
      %v2379 = vadd.f32 %v2266, %v2378
      %v2380 = vpop.f32.mrb[0].mxu0
      %v2381 = vadd.f32 %v2268, %v2380
      %2382 = vmatprep.mubr.bf16.mxu0 %v1150
      %2383 = vmatmul.mubr.bf16.gmra.mrb[0].mxu0 %v1149
      %v2384 = vpop.f32.mrb[0].mxu0
      %v2385 = vadd.f32 %v2272, %v2384
      %v2386 = vpop.f32.mrb[0].mxu0
      %v2387 = vadd.f32 %v2274, %v2386
      %v2388 = vpop.f32.mrb[0].mxu0
      %v2389 = vadd.f32 %v2276, %v2388
      %v2390 = vpop.f32.mrb[0].mxu0
      %v2391 = vadd.f32 %v2278, %v2390
      %2392 = vdwg.mxu0
      %v2393 = vmax.f32 %v2089, 0.0
      %v2394 = vmax.f32 %v2091, 0.0
      %v2395 = vmax.f32 %v2315, 0.0
      %v2396 = vmax.f32 %v2317, 0.0
      %v2397 = vmax.f32 %v2093, 0.0
      %v2398 = vmax.f32 %v2095, 0.0
      %v2399 = vmax.f32 %v2319, 0.0
      %v2400 = vmax.f32 %v2321, 0.0
      %v2401 = vmax.f32 %v2099, 0.0
      %v2402 = vmax.f32 %v2101, 0.0
      %v2403 = vmax.f32 %v2325, 0.0
      %v2404 = vmax.f32 %v2327, 0.0
      %v2405 = vmax.f32 %v2103, 0.0
      %v2406 = vmax.f32 %v2105, 0.0
      %v2407 = vmax.f32 %v2329, 0.0
      %v2408 = vmax.f32 %v2331, 0.0
      %v2409 = vmax.f32 %v2109, 0.0
      %v2410 = vmax.f32 %v2111, 0.0
      %v2411 = vmax.f32 %v2335, 0.0
      %v2412 = vmax.f32 %v2337, 0.0
      %v2413 = vmax.f32 %v2113, 0.0
      %v2414 = vmax.f32 %v2115, 0.0
      %v2415 = vmax.f32 %v2339, 0.0
      %v2416 = vmax.f32 %v2341, 0.0
      %v2417 = vmax.f32 %v2119, 0.0
      %v2418 = vmax.f32 %v2121, 0.0
      %v2419 = vmax.f32 %v2345, 0.0
      %v2420 = vmax.f32 %v2347, 0.0
      %v2421 = vmax.f32 %v2123, 0.0
      %v2422 = vmax.f32 %v2125, 0.0
      %v2423 = vmax.f32 %v2349, 0.0
      %v2424 = vmax.f32 %v2351, 0.0
      %v2425 = vmax.f32 %v2129, 0.0
      %v2426 = vmax.f32 %v2131, 0.0
      %v2427 = vmax.f32 %v2355, 0.0
      %v2428 = vmax.f32 %v2357, 0.0
      %v2429 = vmax.f32 %v2133, 0.0
      %v2430 = vmax.f32 %v2135, 0.0
      %v2431 = vmax.f32 %v2359, 0.0
      %v2432 = vmax.f32 %v2361, 0.0
      %v2433 = vmax.f32 %v2139, 0.0
      %v2434 = vmax.f32 %v2141, 0.0
      %v2435 = vmax.f32 %v2365, 0.0
      %v2436 = vmax.f32 %v2367, 0.0
      %v2437 = vmax.f32 %v2143, 0.0
      %v2438 = vmax.f32 %v2145, 0.0
      %v2439 = vmax.f32 %v2369, 0.0
      %v2440 = vmax.f32 %v2371, 0.0
      %v2441 = vmax.f32 %v2149, 0.0
      %v2442 = vmax.f32 %v2151, 0.0
      %v2443 = vmax.f32 %v2375, 0.0
      %v2444 = vmax.f32 %v2377, 0.0
      %v2445 = vmax.f32 %v2153, 0.0
      %v2446 = vmax.f32 %v2155, 0.0
      %v2447 = vmax.f32 %v2379, 0.0
      %v2448 = vmax.f32 %v2381, 0.0
      %v2449 = vmax.f32 %v2159, 0.0
      %v2450 = vmax.f32 %v2161, 0.0
      %v2451 = vmax.f32 %v2385, 0.0
      %v2452 = vmax.f32 %v2387, 0.0
      %v2453 = vmax.f32 %v2163, 0.0
      %v2454 = vmax.f32 %v2165, 0.0
      %v2455 = vmax.f32 %v2389, 0.0
      %v2456 = vmax.f32 %v2391, 0.0
      %v2457 = vpack.c.bf16 %v2397, %v2393
      %v2458 = vpack.c.bf16 %v2398, %v2394
      %v2459 = vpack.c.bf16 %v2399, %v2395
      %v2460 = vpack.c.bf16 %v2400, %v2396
      %v2461 = vpack.c.bf16 %v2405, %v2401
      %v2462 = vpack.c.bf16 %v2406, %v2402
      %v2463 = vpack.c.bf16 %v2407, %v2403
      %v2464 = vpack.c.bf16 %v2408, %v2404
      %v2465 = vpack.c.bf16 %v2413, %v2409
      %v2466 = vpack.c.bf16 %v2414, %v2410
      %v2467 = vpack.c.bf16 %v2415, %v2411
      %v2468 = vpack.c.bf16 %v2416, %v2412
      %v2469 = vpack.c.bf16 %v2421, %v2417
      %v2470 = vpack.c.bf16 %v2422, %v2418
      %v2471 = vpack.c.bf16 %v2423, %v2419
      %v2472 = vpack.c.bf16 %v2424, %v2420
      %v2473 = vpack.c.bf16 %v2429, %v2425
      %v2474 = vpack.c.bf16 %v2430, %v2426
      %v2475 = vpack.c.bf16 %v2431, %v2427
      %v2476 = vpack.c.bf16 %v2432, %v2428
      %v2477 = vpack.c.bf16 %v2437, %v2433
      %v2478 = vpack.c.bf16 %v2438, %v2434
      %v2479 = vpack.c.bf16 %v2439, %v2435
      %v2480 = vpack.c.bf16 %v2440, %v2436
      %v2481 = vpack.c.bf16 %v2445, %v2441
      %v2482 = vpack.c.bf16 %v2446, %v2442
      %v2483 = vpack.c.bf16 %v2447, %v2443
      %v2484 = vpack.c.bf16 %v2448, %v2444
      %v2485 = vpack.c.bf16 %v2453, %v2449
      %v2486 = vpack.c.bf16 %v2454, %v2450
      %v2487 = vpack.c.bf16 %v2455, %v2451
      %v2488 = vpack.c.bf16 %v2456, %v2452
      %v2489 = vld [vmem:[%s5] sm:$0xf]
      %v2490 = vld [vmem:[%s5 + $0x4] sm:$0xf]
      %v2491 = vld [vmem:[%s5 + $0x8] sm:$0xf]
      %v2492 = vld [vmem:[%s5 + $0xc] sm:$0xf]
      %v2493 = vld [vmem:[%s5 + $0x10] sm:$0xf]
      %v2494 = vld [vmem:[%s5 + $0x14] sm:$0xf]
      %v2495 = vld [vmem:[%s5 + $0x18] sm:$0xf]
      %v2496 = vld [vmem:[%s5 + $0x1c] sm:$0xf]
      %v2497 = vld [vmem:[%s5 + $0x20] sm:$0xf]
      %v2498 = vld [vmem:[%s5 + $0x24] sm:$0xf]
      %v2499 = vld [vmem:[%s5 + $0x28] sm:$0xf]
      %v2500 = vld [vmem:[%s5 + $0x2c] sm:$0xf]
      %v2501 = vld [vmem:[%s5 + $0x30] sm:$0xf]
      %v2502 = vld [vmem:[%s5 + $0x34] sm:$0xf]
      %v2503 = vld [vmem:[%s5 + $0x38] sm:$0xf]
      %v2504 = vld [vmem:[%s5 + $0x3c] sm:$0xf]
      %v2505 = vld [vmem:[%s5 + $0x40] sm:$0xf]
      %v2506 = vld [vmem:[%s5 + $0x44] sm:$0xf]
      %v2507 = vld [vmem:[%s5 + $0x48] sm:$0xf]
      %v2508 = vld [vmem:[%s5 + $0x4c] sm:$0xf]
      %v2509 = vld [vmem:[%s5 + $0x50] sm:$0xf]
      %v2510 = vld [vmem:[%s5 + $0x54] sm:$0xf]
      %v2511 = vld [vmem:[%s5 + $0x58] sm:$0xf]
      %v2512 = vld [vmem:[%s5 + $0x5c] sm:$0xf]
      %v2513 = vld [vmem:[%s5 + $0x60] sm:$0xf]
      %v2514 = vld [vmem:[%s5 + $0x64] sm:$0xf]
      %v2515 = vld [vmem:[%s5 + $0x68] sm:$0xf]
      %v2516 = vld [vmem:[%s5 + $0x6c] sm:$0xf]
      %v2517 = vld [vmem:[%s5 + $0x70] sm:$0xf]
      %v2518 = vld [vmem:[%s5 + $0x74] sm:$0xf]
      %v2519 = vld [vmem:[%s5 + $0x78] sm:$0xf]
      %v2520 = vld [vmem:[%s5 + $0x7c] sm:$0xf]
      %v2521 = vld [vmem:[%s5 + $0x80] sm:$0xf]
      %v2522 = vld [vmem:[%s5 + $0x84] sm:$0xf]
      %v2523 = vld [vmem:[%s5 + $0x88] sm:$0xf]
      %v2524 = vld [vmem:[%s5 + $0x8c] sm:$0xf]
      %v2525 = vld [vmem:[%s5 + $0x90] sm:$0xf]
      %v2526 = vld [vmem:[%s5 + $0x94] sm:$0xf]
      %v2527 = vld [vmem:[%s5 + $0x98] sm:$0xf]
      %v2528 = vld [vmem:[%s5 + $0x9c] sm:$0xf]
      %v2529 = vld [vmem:[%s5 + $0xa0] sm:$0xf]
      %v2530 = vld [vmem:[%s5 + $0xa4] sm:$0xf]
      %v2531 = vld [vmem:[%s5 + $0xa8] sm:$0xf]
      %v2532 = vld [vmem:[%s5 + $0xac] sm:$0xf]
      %v2533 = vld [vmem:[%s5 + $0xb0] sm:$0xf]
      %v2534 = vld [vmem:[%s5 + $0xb4] sm:$0xf]
      %v2535 = vld [vmem:[%s5 + $0xb8] sm:$0xf]
      %v2536 = vld [vmem:[%s5 + $0xbc] sm:$0xf]
      %v2537 = vld [vmem:[%s5 + $0xc0] sm:$0xf]
      %v2538 = vld [vmem:[%s5 + $0xc4] sm:$0xf]
      %v2539 = vld [vmem:[%s5 + $0xc8] sm:$0xf]
      %v2540 = vld [vmem:[%s5 + $0xcc] sm:$0xf]
      %v2541 = vld [vmem:[%s5 + $0xd0] sm:$0xf]
      %v2542 = vld [vmem:[%s5 + $0xd4] sm:$0xf]
      %v2543 = vld [vmem:[%s5 + $0xd8] sm:$0xf]
      %v2544 = vld [vmem:[%s5 + $0xdc] sm:$0xf]
      %v2545 = vld [vmem:[%s5 + $0xe0] sm:$0xf]
      %v2546 = vld [vmem:[%s5 + $0xe4] sm:$0xf]
      %v2547 = vld [vmem:[%s5 + $0xe8] sm:$0xf]
      %v2548 = vld [vmem:[%s5 + $0xec] sm:$0xf]
      %v2549 = vld [vmem:[%s5 + $0xf0] sm:$0xf]
      %v2550 = vld [vmem:[%s5 + $0xf4] sm:$0xf]
      %v2551 = vld [vmem:[%s5 + $0xf8] sm:$0xf]
      %v2552 = vld [vmem:[%s5 + $0xfc] sm:$0xf]
      %v2553 = vld [vmem:[%s6] sm:$0x1]
      %v2555 = vlaneseq
      %v2556 = vshrl.u32 %v2555, 7
      %v2557 = vsub.s32 0, %v2556
      %v2558 = vrot.slane %v2553, %v2557
      %v2624 = vunpack.c.l.b16 %v2489
      %v2625 = vunpack.c.l.b16 %v2490
      %v2626 = vunpack.c.l.b16 %v2491
      %v2627 = vunpack.c.l.b16 %v2492
      %v2628 = vunpack.c.l.b16 %v2493
      %v2629 = vunpack.c.l.b16 %v2494
      %v2630 = vunpack.c.l.b16 %v2495
      %v2631 = vunpack.c.l.b16 %v2496
      %v2632 = vunpack.c.l.b16 %v2497
      %v2633 = vunpack.c.l.b16 %v2498
      %v2634 = vunpack.c.l.b16 %v2499
      %v2635 = vunpack.c.l.b16 %v2500
      %v2636 = vunpack.c.l.b16 %v2501
      %v2637 = vunpack.c.l.b16 %v2502
      %v2638 = vunpack.c.l.b16 %v2503
      %v2639 = vunpack.c.l.b16 %v2504
      %v2640 = vunpack.c.l.b16 %v2505
      %v2641 = vunpack.c.l.b16 %v2506
      %v2642 = vunpack.c.l.b16 %v2507
      %v2643 = vunpack.c.l.b16 %v2508
      %v2644 = vunpack.c.l.b16 %v2509
      %v2645 = vunpack.c.l.b16 %v2510
      %v2646 = vunpack.c.l.b16 %v2511
      %v2647 = vunpack.c.l.b16 %v2512
      %v2648 = vunpack.c.l.b16 %v2513
      %v2649 = vunpack.c.l.b16 %v2514
      %v2650 = vunpack.c.l.b16 %v2515
      %v2651 = vunpack.c.l.b16 %v2516
      %v2652 = vunpack.c.l.b16 %v2517
      %v2653 = vunpack.c.l.b16 %v2518
      %v2654 = vunpack.c.l.b16 %v2519
      %v2655 = vunpack.c.l.b16 %v2520
      %v2656 = vunpack.c.l.b16 %v2521
      %v2657 = vunpack.c.l.b16 %v2522
      %v2658 = vunpack.c.l.b16 %v2523
      %v2659 = vunpack.c.l.b16 %v2524
      %v2660 = vunpack.c.l.b16 %v2525
      %v2661 = vunpack.c.l.b16 %v2526
      %v2662 = vunpack.c.l.b16 %v2527
      %v2663 = vunpack.c.l.b16 %v2528
      %v2664 = vunpack.c.l.b16 %v2529
      %v2665 = vunpack.c.l.b16 %v2530
      %v2666 = vunpack.c.l.b16 %v2531
      %v2667 = vunpack.c.l.b16 %v2532
      %v2668 = vunpack.c.l.b16 %v2533
      %v2669 = vunpack.c.l.b16 %v2534
      %v2670 = vunpack.c.l.b16 %v2535
      %v2671 = vunpack.c.l.b16 %v2536
      %v2672 = vunpack.c.l.b16 %v2537
      %v2673 = vunpack.c.l.b16 %v2538
      %v2674 = vunpack.c.l.b16 %v2539
      %v2675 = vunpack.c.l.b16 %v2540
      %v2676 = vunpack.c.l.b16 %v2541
      %v2677 = vunpack.c.l.b16 %v2542
      %v2678 = vunpack.c.l.b16 %v2543
      %v2679 = vunpack.c.l.b16 %v2544
      %v2680 = vunpack.c.l.b16 %v2545
      %v2681 = vunpack.c.l.b16 %v2546
      %v2682 = vunpack.c.l.b16 %v2547
      %v2683 = vunpack.c.l.b16 %v2548
      %v2684 = vunpack.c.l.b16 %v2549
      %v2685 = vunpack.c.l.b16 %v2550
      %v2686 = vunpack.c.l.b16 %v2551
      %v2687 = vunpack.c.l.b16 %v2552
      %v2688 = vpack.c.b16 %v2625, %v2624
      %v2689 = vpack.c.b16 %v2627, %v2626
      %v2690 = vpack.c.b16 %v2629, %v2628
      %v2691 = vpack.c.b16 %v2631, %v2630
      %v2692 = vpack.c.b16 %v2633, %v2632
      %v2693 = vpack.c.b16 %v2635, %v2634
      %v2694 = vpack.c.b16 %v2637, %v2636
      %v2695 = vpack.c.b16 %v2639, %v2638
      %v2696 = vpack.c.b16 %v2641, %v2640
      %v2697 = vpack.c.b16 %v2643, %v2642
      %v2698 = vpack.c.b16 %v2645, %v2644
      %v2699 = vpack.c.b16 %v2647, %v2646
      %v2700 = vpack.c.b16 %v2649, %v2648
      %v2701 = vpack.c.b16 %v2651, %v2650
      %v2702 = vpack.c.b16 %v2653, %v2652
      %v2703 = vpack.c.b16 %v2655, %v2654
      %v2704 = vpack.c.b16 %v2657, %v2656
      %v2705 = vpack.c.b16 %v2659, %v2658
      %v2706 = vpack.c.b16 %v2661, %v2660
      %v2707 = vpack.c.b16 %v2663, %v2662
      %v2708 = vpack.c.b16 %v2665, %v2664
      %v2709 = vpack.c.b16 %v2667, %v2666
      %v2710 = vpack.c.b16 %v2669, %v2668
      %v2711 = vpack.c.b16 %v2671, %v2670
      %v2712 = vpack.c.b16 %v2673, %v2672
      %v2713 = vpack.c.b16 %v2675, %v2674
      %v2714 = vpack.c.b16 %v2677, %v2676
      %v2715 = vpack.c.b16 %v2679, %v2678
      %v2716 = vpack.c.b16 %v2681, %v2680
      %v2717 = vpack.c.b16 %v2683, %v2682
      %v2718 = vpack.c.b16 %v2685, %v2684
      %v2719 = vpack.c.b16 %v2687, %v2686
      %2752 = vmatprep.subr.bf16.mxu0 0
      %2753 = vmatpush1.bf16.msra.mxu0 %v2688
      %2754 = vmatprep.subr.bf16.mxu0 0
      %2755 = vmatpush1.bf16.msra.mxu0 %v2689
      %2756 = vmatprep.subr.bf16.mxu0 0
      %2757 = vmatpush1.bf16.msra.mxu0 %v2690
      %2758 = vmatprep.subr.bf16.mxu0 0
      %2759 = vmatpush1.bf16.msra.mxu0 %v2691
      %2760 = vmatprep.subr.bf16.mxu0 0
      %2761 = vmatpush1.bf16.msra.mxu0 %v2692
      %2762 = vmatprep.subr.bf16.mxu0 0
      %2763 = vmatpush1.bf16.msra.mxu0 %v2693
      %2764 = vmatprep.subr.bf16.mxu0 0
      %2765 = vmatpush1.bf16.msra.mxu0 %v2694
      %2766 = vmatprep.subr.bf16.mxu0 0
      %2767 = vmatpush1.bf16.msra.mxu0 %v2695
      %2768 = vmatprep.subr.bf16.mxu0 0
      %2769 = vmatpush1.bf16.msra.mxu0 %v2696
      %2770 = vmatprep.subr.bf16.mxu0 0
      %2771 = vmatpush1.bf16.msra.mxu0 %v2697
      %2772 = vmatprep.subr.bf16.mxu0 0
      %2773 = vmatpush1.bf16.msra.mxu0 %v2698
      %2774 = vmatprep.subr.bf16.mxu0 0
      %2775 = vmatpush1.bf16.msra.mxu0 %v2699
      %2776 = vmatprep.subr.bf16.mxu0 0
      %2777 = vmatpush1.bf16.msra.mxu0 %v2700
      %2778 = vmatprep.subr.bf16.mxu0 0
      %2779 = vmatpush1.bf16.msra.mxu0 %v2701
      %2780 = vmatprep.subr.bf16.mxu0 0
      %2781 = vmatpush1.bf16.msra.mxu0 %v2702
      %2782 = vmatprep.subr.bf16.mxu0 0
      %2783 = vmatpush1.bf16.msra.mxu0 %v2703
      %2784 = vmatprep.mubr.bf16.mxu0 %v2458
      %2785 = vmatmul.mubr.bf16.gmra.mrb[0].mxu0 %v2457
      %v2786 = vpop.f32.mrb[0].mxu0
      %v2787 = vadd.f32 %v2558, %v2786
      %v2788 = vpop.f32.mrb[0].mxu0
      %v2789 = vpop.f32.mrb[0].mxu0
      %v2790 = vadd.f32 %v2558, %v2789
      %v2791 = vpop.f32.mrb[0].mxu0
      %2792 = vmatprep.mubr.bf16.mxu0 %v2462
      %2793 = vmatmul.mubr.bf16.gmra.mrb[0].mxu0 %v2461
      %v2794 = vpop.f32.mrb[0].mxu0
      %v2795 = vadd.f32 %v2558, %v2794
      %v2796 = vpop.f32.mrb[0].mxu0
      %v2797 = vpop.f32.mrb[0].mxu0
      %v2798 = vadd.f32 %v2558, %v2797
      %v2799 = vpop.f32.mrb[0].mxu0
      %2800 = vmatprep.mubr.bf16.mxu0 %v2466
      %2801 = vmatmul.mubr.bf16.gmra.mrb[0].mxu0 %v2465
      %v2802 = vpop.f32.mrb[0].mxu0
      %v2803 = vadd.f32 %v2558, %v2802
      %v2804 = vpop.f32.mrb[0].mxu0
      %v2805 = vpop.f32.mrb[0].mxu0
      %v2806 = vadd.f32 %v2558, %v2805
      %v2807 = vpop.f32.mrb[0].mxu0
      %2808 = vmatprep.mubr.bf16.mxu0 %v2470
      %2809 = vmatmul.mubr.bf16.gmra.mrb[0].mxu0 %v2469
      %v2810 = vpop.f32.mrb[0].mxu0
      %v2811 = vadd.f32 %v2558, %v2810
      %v2812 = vpop.f32.mrb[0].mxu0
      %v2813 = vpop.f32.mrb[0].mxu0
      %v2814 = vadd.f32 %v2558, %v2813
      %v2815 = vpop.f32.mrb[0].mxu0
      %2816 = vmatprep.mubr.bf16.mxu0 %v2474
      %2817 = vmatmul.mubr.bf16.gmra.mrb[0].mxu0 %v2473
      %v2818 = vpop.f32.mrb[0].mxu0
      %v2819 = vadd.f32 %v2558, %v2818
      %v2820 = vpop.f32.mrb[0].mxu0
      %v2821 = vpop.f32.mrb[0].mxu0
      %v2822 = vadd.f32 %v2558, %v2821
      %v2823 = vpop.f32.mrb[0].mxu0
      %2824 = vmatprep.mubr.bf16.mxu0 %v2478
      %2825 = vmatmul.mubr.bf16.gmra.mrb[0].mxu0 %v2477
      %v2826 = vpop.f32.mrb[0].mxu0
      %v2827 = vadd.f32 %v2558, %v2826
      %v2828 = vpop.f32.mrb[0].mxu0
      %v2829 = vpop.f32.mrb[0].mxu0
      %v2830 = vadd.f32 %v2558, %v2829
      %v2831 = vpop.f32.mrb[0].mxu0
      %2832 = vmatprep.mubr.bf16.mxu0 %v2482
      %2833 = vmatmul.mubr.bf16.gmra.mrb[0].mxu0 %v2481
      %v2834 = vpop.f32.mrb[0].mxu0
      %v2835 = vadd.f32 %v2558, %v2834
      %v2836 = vpop.f32.mrb[0].mxu0
      %v2837 = vpop.f32.mrb[0].mxu0
      %v2838 = vadd.f32 %v2558, %v2837
      %v2839 = vpop.f32.mrb[0].mxu0
      %2840 = vmatprep.mubr.bf16.mxu0 %v2486
      %2841 = vmatmul.mubr.bf16.gmra.mrb[0].mxu0 %v2485
      %v2842 = vpop.f32.mrb[0].mxu0
      %v2843 = vadd.f32 %v2558, %v2842
      %v2844 = vpop.f32.mrb[0].mxu0
      %v2845 = vpop.f32.mrb[0].mxu0
      %v2846 = vadd.f32 %v2558, %v2845
      %v2847 = vpop.f32.mrb[0].mxu0
      %2848 = vdwg.mxu0
      %2849 = vmatprep.subr.bf16.mxu0 0
      %2850 = vmatpush1.bf16.msra.mxu0 %v2704
      %2851 = vmatprep.subr.bf16.mxu0 0
      %2852 = vmatpush1.bf16.msra.mxu0 %v2705
      %2853 = vmatprep.subr.bf16.mxu0 0
      %2854 = vmatpush1.bf16.msra.mxu0 %v2706
      %2855 = vmatprep.subr.bf16.mxu0 0
      %2856 = vmatpush1.bf16.msra.mxu0 %v2707
      %2857 = vmatprep.subr.bf16.mxu0 0
      %2858 = vmatpush1.bf16.msra.mxu0 %v2708
      %2859 = vmatprep.subr.bf16.mxu0 0
      %2860 = vmatpush1.bf16.msra.mxu0 %v2709
      %2861 = vmatprep.subr.bf16.mxu0 0
      %2862 = vmatpush1.bf16.msra.mxu0 %v2710
      %2863 = vmatprep.subr.bf16.mxu0 0
      %2864 = vmatpush1.bf16.msra.mxu0 %v2711
      %2865 = vmatprep.subr.bf16.mxu0 0
      %2866 = vmatpush1.bf16.msra.mxu0 %v2712
      %2867 = vmatprep.subr.bf16.mxu0 0
      %2868 = vmatpush1.bf16.msra.mxu0 %v2713
      %2869 = vmatprep.subr.bf16.mxu0 0
      %2870 = vmatpush1.bf16.msra.mxu0 %v2714
      %2871 = vmatprep.subr.bf16.mxu0 0
      %2872 = vmatpush1.bf16.msra.mxu0 %v2715
      %2873 = vmatprep.subr.bf16.mxu0 0
      %2874 = vmatpush1.bf16.msra.mxu0 %v2716
      %2875 = vmatprep.subr.bf16.mxu0 0
      %2876 = vmatpush1.bf16.msra.mxu0 %v2717
      %2877 = vmatprep.subr.bf16.mxu0 0
      %2878 = vmatpush1.bf16.msra.mxu0 %v2718
      %2879 = vmatprep.subr.bf16.mxu0 0
      %2880 = vmatpush1.bf16.msra.mxu0 %v2719
      %2881 = vmatprep.mubr.bf16.mxu0 %v2460
      %2882 = vmatmul.mubr.bf16.gmra.mrb[0].mxu0 %v2459
      %v2883 = vpop.f32.mrb[0].mxu0
      %v2884 = vadd.f32 %v2787, %v2883
      %v2885 = vpop.f32.mrb[0].mxu0
      %v2886 = vpop.f32.mrb[0].mxu0
      %v2887 = vadd.f32 %v2790, %v2886
      %v2888 = vpop.f32.mrb[0].mxu0
      %2889 = vmatprep.mubr.bf16.mxu0 %v2464
      %2890 = vmatmul.mubr.bf16.gmra.mrb[0].mxu0 %v2463
      %v2891 = vpop.f32.mrb[0].mxu0
      %v2892 = vadd.f32 %v2795, %v2891
      %v2893 = vpop.f32.mrb[0].mxu0
      %v2894 = vpop.f32.mrb[0].mxu0
      %v2895 = vadd.f32 %v2798, %v2894
      %v2896 = vpop.f32.mrb[0].mxu0
      %2897 = vmatprep.mubr.bf16.mxu0 %v2468
      %2898 = vmatmul.mubr.bf16.gmra.mrb[0].mxu0 %v2467
      %v2899 = vpop.f32.mrb[0].mxu0
      %v2900 = vadd.f32 %v2803, %v2899
      %v2901 = vpop.f32.mrb[0].mxu0
      %v2902 = vpop.f32.mrb[0].mxu0
      %v2903 = vadd.f32 %v2806, %v2902
      %v2904 = vpop.f32.mrb[0].mxu0
      %2905 = vmatprep.mubr.bf16.mxu0 %v2472
      %2906 = vmatmul.mubr.bf16.gmra.mrb[0].mxu0 %v2471
      %v2907 = vpop.f32.mrb[0].mxu0
      %v2908 = vadd.f32 %v2811, %v2907
      %v2909 = vpop.f32.mrb[0].mxu0
      %v2910 = vpop.f32.mrb[0].mxu0
      %v2911 = vadd.f32 %v2814, %v2910
      %v2912 = vpop.f32.mrb[0].mxu0
      %2913 = vmatprep.mubr.bf16.mxu0 %v2476
      %2914 = vmatmul.mubr.bf16.gmra.mrb[0].mxu0 %v2475
      %v2915 = vpop.f32.mrb[0].mxu0
      %v2916 = vadd.f32 %v2819, %v2915
      %v2917 = vpop.f32.mrb[0].mxu0
      %v2918 = vpop.f32.mrb[0].mxu0
      %v2919 = vadd.f32 %v2822, %v2918
      %v2920 = vpop.f32.mrb[0].mxu0
      %2921 = vmatprep.mubr.bf16.mxu0 %v2480
      %2922 = vmatmul.mubr.bf16.gmra.mrb[0].mxu0 %v2479
      %v2923 = vpop.f32.mrb[0].mxu0
      %v2924 = vadd.f32 %v2827, %v2923
      %v2925 = vpop.f32.mrb[0].mxu0
      %v2926 = vpop.f32.mrb[0].mxu0
      %v2927 = vadd.f32 %v2830, %v2926
      %v2928 = vpop.f32.mrb[0].mxu0
      %2929 = vmatprep.mubr.bf16.mxu0 %v2484
      %2930 = vmatmul.mubr.bf16.gmra.mrb[0].mxu0 %v2483
      %v2931 = vpop.f32.mrb[0].mxu0
      %v2932 = vadd.f32 %v2835, %v2931
      %v2933 = vpop.f32.mrb[0].mxu0
      %v2934 = vpop.f32.mrb[0].mxu0
      %v2935 = vadd.f32 %v2838, %v2934
      %v2936 = vpop.f32.mrb[0].mxu0
      %2937 = vmatprep.mubr.bf16.mxu0 %v2488
      %2938 = vmatmul.mubr.bf16.gmra.mrb[0].mxu0 %v2487
      %v2939 = vpop.f32.mrb[0].mxu0
      %v2940 = vadd.f32 %v2843, %v2939
      %v2941 = vpop.f32.mrb[0].mxu0
      %v2942 = vpop.f32.mrb[0].mxu0
      %v2943 = vadd.f32 %v2846, %v2942
      %v2944 = vpop.f32.mrb[0].mxu0
      %2945 = vdwg.mxu0
      %2946 = vst [vmem:[%s318] sm:$0xff] %v2884
      %2947 = vst [vmem:[%s318 + $0x8] sm:$0xff] %v2887
      %2948 = vst [vmem:[%s318 + $0x10] sm:$0xff] %v2892
      %2949 = vst [vmem:[%s318 + $0x18] sm:$0xff] %v2895
      %2950 = vst [vmem:[%s318 + $0x20] sm:$0xff] %v2900
      %2951 = vst [vmem:[%s318 + $0x28] sm:$0xff] %v2903
      %2952 = vst [vmem:[%s318 + $0x30] sm:$0xff] %v2908
      %2953 = vst [vmem:[%s318 + $0x38] sm:$0xff] %v2911
      %2954 = vst [vmem:[%s318 + $0x40] sm:$0xff] %v2916
      %2955 = vst [vmem:[%s318 + $0x48] sm:$0xff] %v2919
      %2956 = vst [vmem:[%s318 + $0x50] sm:$0xff] %v2924
      %2957 = vst [vmem:[%s318 + $0x58] sm:$0xff] %v2927
      %2958 = vst [vmem:[%s318 + $0x60] sm:$0xff] %v2932
      %2959 = vst [vmem:[%s318 + $0x68] sm:$0xff] %v2935
      %2960 = vst [vmem:[%s318 + $0x70] sm:$0xff] %v2940
      %2961 = vst [vmem:[%s318 + $0x78] sm:$0xff] %v2943
      %2962 = vmax.xlane.f32.xlu0 %v2884
      %v2963 = vpop.xlane.xlu0 %2962
      %2964 = vmax.xlane.f32.xlu0 %v2887
      %v2965 = vpop.xlane.xlu0 %2964
      %2966 = vmax.xlane.f32.xlu0 %v2892
      %v2967 = vpop.xlane.xlu0 %2966
      %2968 = vmax.xlane.f32.xlu0 %v2895
      %v2969 = vpop.xlane.xlu0 %2968
      %2970 = vmax.xlane.f32.xlu0 %v2900
      %v2971 = vpop.xlane.xlu0 %2970
      %2972 = vmax.xlane.f32.xlu0 %v2903
      %v2973 = vpop.xlane.xlu0 %2972
      %2974 = vmax.xlane.f32.xlu0 %v2908
      %v2975 = vpop.xlane.xlu0 %2974
      %2976 = vmax.xlane.f32.xlu0 %v2911
      %v2977 = vpop.xlane.xlu0 %2976
      %2978 = vmax.xlane.f32.xlu0 %v2916
      %v2979 = vpop.xlane.xlu0 %2978
      %2980 = vmax.xlane.f32.xlu0 %v2919
      %v2981 = vpop.xlane.xlu0 %2980
      %2982 = vmax.xlane.f32.xlu0 %v2924
      %v2983 = vpop.xlane.xlu0 %2982
      %2984 = vmax.xlane.f32.xlu0 %v2927
      %v2985 = vpop.xlane.xlu0 %2984
      %2986 = vmax.xlane.f32.xlu0 %v2932
      %v2987 = vpop.xlane.xlu0 %2986
      %2988 = vmax.xlane.f32.xlu0 %v2935
      %v2989 = vpop.xlane.xlu0 %2988
      %2990 = vmax.xlane.f32.xlu0 %v2940
      %v2991 = vpop.xlane.xlu0 %2990
      %2992 = vmax.xlane.f32.xlu0 %v2943
      %v2993 = vpop.xlane.xlu0 %2992
      %v2994 = vsub.f32 %v2884, %v2963
      %v2995 = vsub.f32 %v2887, %v2965
      %v2996 = vsub.f32 %v2892, %v2967
      %v2997 = vsub.f32 %v2895, %v2969
      %v2998 = vsub.f32 %v2900, %v2971
      %v2999 = vsub.f32 %v2903, %v2973
      %v3000 = vsub.f32 %v2908, %v2975
      %v3001 = vsub.f32 %v2911, %v2977
      %v3002 = vsub.f32 %v2916, %v2979
      %v3003 = vsub.f32 %v2919, %v2981
      %v3004 = vsub.f32 %v2924, %v2983
      %v3005 = vsub.f32 %v2927, %v2985
      %v3006 = vsub.f32 %v2932, %v2987
      %v3007 = vsub.f32 %v2935, %v2989
      %v3008 = vsub.f32 %v2940, %v2991
      %v3009 = vsub.f32 %v2943, %v2993
      %v3010 = vmul.f32 %v2994, 1.442695
      %v3011 = vpow.pop %v3010
      %v3012 = vmul.f32 %v2995, 1.442695
      %v3013 = vpow.pop %v3012
      %v3014 = vmul.f32 %v2996, 1.442695
      %v3015 = vpow.pop %v3014
      %v3016 = vmul.f32 %v2997, 1.442695
      %v3017 = vpow.pop %v3016
      %v3018 = vmul.f32 %v2998, 1.442695
      %v3019 = vpow.pop %v3018
      %v3020 = vmul.f32 %v2999, 1.442695
      %v3021 = vpow.pop %v3020
      %v3022 = vmul.f32 %v3000, 1.442695
      %v3023 = vpow.pop %v3022
      %v3024 = vmul.f32 %v3001, 1.442695
      %v3025 = vpow.pop %v3024
      %v3026 = vmul.f32 %v3002, 1.442695
      %v3027 = vpow.pop %v3026
      %v3028 = vmul.f32 %v3003, 1.442695
      %v3029 = vpow.pop %v3028
      %v3030 = vmul.f32 %v3004, 1.442695
      %v3031 = vpow.pop %v3030
      %v3032 = vmul.f32 %v3005, 1.442695
      %v3033 = vpow.pop %v3032
      %v3034 = vmul.f32 %v3006, 1.442695
      %v3035 = vpow.pop %v3034
      %v3036 = vmul.f32 %v3007, 1.442695
      %v3037 = vpow.pop %v3036
      %v3038 = vmul.f32 %v3008, 1.442695
      %v3039 = vpow.pop %v3038
      %v3040 = vmul.f32 %v3009, 1.442695
      %v3041 = vpow.pop %v3040
      %3042 = vadd.xlane.f32.xlu0 %v3011
      %v3043 = vpop.xlane.xlu0 %3042
      %3044 = vadd.xlane.f32.xlu0 %v3013
      %v3045 = vpop.xlane.xlu0 %3044
      %3046 = vadd.xlane.f32.xlu0 %v3015
      %v3047 = vpop.xlane.xlu0 %3046
      %3048 = vadd.xlane.f32.xlu0 %v3017
      %v3049 = vpop.xlane.xlu0 %3048
      %3050 = vadd.xlane.f32.xlu0 %v3019
      %v3051 = vpop.xlane.xlu0 %3050
      %3052 = vadd.xlane.f32.xlu0 %v3021
      %v3053 = vpop.xlane.xlu0 %3052
      %3054 = vadd.xlane.f32.xlu0 %v3023
      %v3055 = vpop.xlane.xlu0 %3054
      %3056 = vadd.xlane.f32.xlu0 %v3025
      %v3057 = vpop.xlane.xlu0 %3056
      %3058 = vadd.xlane.f32.xlu0 %v3027
      %v3059 = vpop.xlane.xlu0 %3058
      %3060 = vadd.xlane.f32.xlu0 %v3029
      %v3061 = vpop.xlane.xlu0 %3060
      %3062 = vadd.xlane.f32.xlu0 %v3031
      %v3063 = vpop.xlane.xlu0 %3062
      %3064 = vadd.xlane.f32.xlu0 %v3033
      %v3065 = vpop.xlane.xlu0 %3064
      %3066 = vadd.xlane.f32.xlu0 %v3035
      %v3067 = vpop.xlane.xlu0 %3066
      %3068 = vadd.xlane.f32.xlu0 %v3037
      %v3069 = vpop.xlane.xlu0 %3068
      %3070 = vadd.xlane.f32.xlu0 %v3039
      %v3071 = vpop.xlane.xlu0 %3070
      %3072 = vadd.xlane.f32.xlu0 %v3041
      %v3073 = vpop.xlane.xlu0 %3072
      %v3074 = vrcp.pop %v3043
      %v3075 = vrcp.pop %v3045
      %v3076 = vrcp.pop %v3047
      %v3077 = vrcp.pop %v3049
      %v3078 = vrcp.pop %v3051
      %v3079 = vrcp.pop %v3053
      %v3080 = vrcp.pop %v3055
      %v3081 = vrcp.pop %v3057
      %v3082 = vrcp.pop %v3059
      %v3083 = vrcp.pop %v3061
      %v3084 = vrcp.pop %v3063
      %v3085 = vrcp.pop %v3065
      %v3086 = vrcp.pop %v3067
      %v3087 = vrcp.pop %v3069
      %v3088 = vrcp.pop %v3071
      %v3089 = vrcp.pop %v3073
      %v3090 = vmul.f32 %v3011, %v3074
      %v3091 = vmul.f32 %v3013, %v3075
      %v3092 = vmul.f32 %v3015, %v3076
      %v3093 = vmul.f32 %v3017, %v3077
      %v3094 = vmul.f32 %v3019, %v3078
      %v3095 = vmul.f32 %v3021, %v3079
      %v3096 = vmul.f32 %v3023, %v3080
      %v3097 = vmul.f32 %v3025, %v3081
      %v3098 = vmul.f32 %v3027, %v3082
      %v3099 = vmul.f32 %v3029, %v3083
      %v3100 = vmul.f32 %v3031, %v3084
      %v3101 = vmul.f32 %v3033, %v3085
      %v3102 = vmul.f32 %v3035, %v3086
      %v3103 = vmul.f32 %v3037, %v3087
      %v3104 = vmul.f32 %v3039, %v3088
      %v3105 = vmul.f32 %v3041, %v3089
      %3106 = vst [vmem:[%s324] sm:$0xff] %v3090
      %3107 = vst [vmem:[%s324 + $0x8] sm:$0xff] %v3091
      %3108 = vst [vmem:[%s324 + $0x10] sm:$0xff] %v3092
      %3109 = vst [vmem:[%s324 + $0x18] sm:$0xff] %v3093
      %3110 = vst [vmem:[%s324 + $0x20] sm:$0xff] %v3094
      %3111 = vst [vmem:[%s324 + $0x28] sm:$0xff] %v3095
      %3112 = vst [vmem:[%s324 + $0x30] sm:$0xff] %v3096
      %3113 = vst [vmem:[%s324 + $0x38] sm:$0xff] %v3097
      %3114 = vst [vmem:[%s324 + $0x40] sm:$0xff] %v3098
      %3115 = vst [vmem:[%s324 + $0x48] sm:$0xff] %v3099
      %3116 = vst [vmem:[%s324 + $0x50] sm:$0xff] %v3100
      %3117 = vst [vmem:[%s324 + $0x58] sm:$0xff] %v3101
      %3118 = vst [vmem:[%s324 + $0x60] sm:$0xff] %v3102
      %3119 = vst [vmem:[%s324 + $0x68] sm:$0xff] %v3103
      %3120 = vst [vmem:[%s324 + $0x70] sm:$0xff] %v3104
      %3121 = vst [vmem:[%s324 + $0x78] sm:$0xff] %v3105
      %s3122 = smul.u32 16, %s20
      %p3123 = scmp.lt.s32.totalorder %s3122, 31
      %s3124 = scalar_select %p3123, %s3122, 31
      %s3125 = smul.addr %s3124, 8
      %s3126 = scalar_lea.vmem %s7, %s3125
      %s3127 = smul.u32 16, %s20
      %p3128 = scmp.lt.s32.totalorder %s3127, 31
      %s3129 = scalar_select %p3128, %s3127, 31
      %s3130 = smul.addr %s3129, 8
      %s3131 = scalar_lea.vmem %s8, %s3130
      // Predicated region
      $region49: #{nonlinear_classifier_forward.1} parent=47 // pred_check
        %p3132 = pneg %p190
      $region50: #{nonlinear_classifier_forward.1} parent=47 // pred_check_branch
        %3134 = sbr.rel (%p3132) target = $region52
      $region51: #{nonlinear_classifier_forward.1} parent=47 // pred_region
        %s3135 = smul.u32 16, %s20
      $region52: #{nonlinear_classifier_forward.1} parent=47 // pred_fallthru
        _
      // Predicated region
      $region53: #{nonlinear_classifier_forward.1} parent=47 // pred_check
        %p3136 = pneg %p216
      $region54: #{nonlinear_classifier_forward.1} parent=47 // pred_check_branch
        %3138 = sbr.rel (%p3136) target = $region56
      $region55: #{nonlinear_classifier_forward.1} parent=47 // pred_region
        %s3139 = smul.u32 16, %s20
      $region56: #{nonlinear_classifier_forward.1} parent=47 // pred_fallthru
        _
    $region48: #{nonlinear_classifier_forward.1} parent=5 // pred_fallthru
      _
    %p3140 = scmp.le.s32.totalorder 2, %s15
    // Predicated region
    $region57: #{nonlinear_classifier_forward.1} parent=5 // pred_check
      %p3141 = pneg %p3140
    $region58: #{nonlinear_classifier_forward.1} parent=5 // pred_check_branch
      %3143 = sbr.rel (%p3141) target = $region60
    $region59: #{nonlinear_classifier_forward.1} parent=5 // pred_region
      %s3144 = ssub.s32 %s15, 2
      // Predicated region
      $region61: #{nonlinear_classifier_forward.1} parent=59 // pred_check
        %p3145 = pneg %p196
      $region62: #{nonlinear_classifier_forward.1} parent=59 // pred_check_branch
        %3147 = sbr.rel (%p3145) target = $region64
      $region63: #{nonlinear_classifier_forward.1} parent=59 // pred_region
        %s3148 = smul.u32 16, %s21
        %p3149 = scmp.lt.s32.totalorder %s3148, 31
        %s3150 = scalar_select %p3149, %s3148, 31
        %s3151 = smul.addr %s3150, 8
        %s3152 = scalar_lea.vmem %s7, %s3151
      $region64: #{nonlinear_classifier_forward.1} parent=59 // pred_fallthru
        _
      // Predicated region
      $region65: #{nonlinear_classifier_forward.1} parent=59 // pred_check
        %p3153 = pneg %p222
      $region66: #{nonlinear_classifier_forward.1} parent=59 // pred_check_branch
        %3155 = sbr.rel (%p3153) target = $region68
      $region67: #{nonlinear_classifier_forward.1} parent=59 // pred_region
        %s3156 = smul.u32 16, %s21
        %p3157 = scmp.lt.s32.totalorder %s3156, 31
        %s3158 = scalar_select %p3157, %s3156, 31
        %s3159 = smul.addr %s3158, 8
        %s3160 = scalar_lea.vmem %s8, %s3159
      $region68: #{nonlinear_classifier_forward.1} parent=59 // pred_fallthru
        _
    $region60: #{nonlinear_classifier_forward.1} parent=5 // pred_fallthru
      _
  $region6: #{nonlinear_classifier_forward.1} parent=0 // loop_footer
    %s19 = sadd.s32 1, %s15
  $region7: #{nonlinear_classifier_forward.1} parent=0 // loop_footer_branch
    %14 = sbr.rel target = $region3
  $region8: #{nonlinear_classifier_forward.1} parent=0 // loop_exit
    _

</llo_original>
